<compile_context>
chip_gen: v6e
topology: v6e:2x2x1
jax: 0.10.0
libtpu: 0.0.40
codegen_flags: <defaults>
</compile_context>

<pallas_src>
import functools

import jax
import jax.numpy as jnp
from jax import lax
from jax.experimental import pallas as pl
from jax.experimental.pallas import tpu as pltpu


def bow_gather_kernel(ids_ref, w_ref, o_ref, *, sc, batch):
    """One grid step: accumulate `sc` sequence positions into the resident out.

    ids_ref : SMEM (S*B,) int32, flattened row-major token ids (scalar prefetch)
    w_ref   : VMEM (V, te)  resident embedding-table slab for this E tile
    o_ref   : VMEM (B, te)  resident accumulator (same block for every s step)
    """
    s = pl.program_id(1)

    # Zero the resident accumulator on the first sequence chunk.
    @pl.when(s == 0)
    def _():
        o_ref[...] = jnp.zeros_like(o_ref)

    base = s * (sc * batch)

    def seq_body(i, carry):
        off = base + i * batch
        for b in range(batch):  # batch is small and static
            tok = ids_ref[off + b]                      # scalar read from SMEM
            row = w_ref[pl.ds(tok, 1), :]               # (1, te) gather from resident VMEM slab
            o_ref[pl.ds(b, 1), :] = o_ref[pl.ds(b, 1), :] + row
        return carry

    # Short fixed trip count -> unroll for LLO scheduler visibility.
    lax.fori_loop(0, sc, seq_body, 0, unroll=True)


def bow_encoder(x, w, *, te=None, sc=None):
    """x: (S, B) int32 token ids, w: (V, E) float32 table -> (B, E) float32."""
    S, B = x.shape
    V, E = w.shape

    # E tile: 128 keeps the parallel axis extent >= 2 whenever E >= 256 (v7x
    # megacore) and keeps the resident (V, te) slab small; fall back to the
    # full E when it is not lane-aligned.
    if te is None:
        te = 128 if E % 128 == 0 else E
    assert E % te == 0, "embed_dim must be divisible by the E tile"

    # Sequence chunk per grid step (amortizes per-step overhead).
    if sc is None:
        sc = next(c for c in (16, 8, 4, 2, 1) if S % c == 0)
    assert S % sc == 0

    # nn.Embedding would raise on out-of-range ids; clamp so the in-kernel
    # dynamic row read never leaves the table (no runtime bounds check!).
    # Flatten to 1-D for cheap SMEM residency.
    ids_flat = jnp.clip(x.astype(jnp.int32), 0, V - 1).reshape(-1)  # (S*B,)

    grid = (E // te, S // sc)

    # W slab: whole vocab along sublanes, one te tile along lanes; block index
    # is constant over the sequence axis so it is fetched once per E tile.
    w_spec = pl.BlockSpec((V, te), lambda e, s, ids: (0, e))
    out_spec = pl.BlockSpec((B, te), lambda e, s, ids: (0, e))

    # VMEM budget: double-buffered W slab + output block + slack; stay within
    # v7x's smaller VMEM while allowing bigger vocabularies on v5e/v6e.
    vmem_needed = 2 * V * te * 4 + 4 * B * te * 4 + (1 << 20)
    vmem_limit = int(min(max(vmem_needed, 32 * 1024 * 1024), 96 * 1024 * 1024))

    cost = pl.CostEstimate(
        flops=S * B * E,                 # one add per gathered element
        transcendentals=0,
        bytes_accessed=V * E * 4         # table read once per E tile
        + B * E * 4                      # output write
        + S * B * 4,                     # token ids
    )

    kernel = functools.partial(bow_gather_kernel, sc=sc, batch=B)

    return pl.pallas_call(
        kernel,
        out_shape=jax.ShapeDtypeStruct((B, E), w.dtype),
        grid_spec=pltpu.PrefetchScalarGridSpec(
            num_scalar_prefetch=1,
            grid=grid,
            in_specs=[w_spec],
            out_specs=out_spec,
        ),
        compiler_params=pltpu.CompilerParams(
            dimension_semantics=("parallel", "arbitrary"),
            vmem_limit_bytes=vmem_limit,
        ),
        cost_estimate=cost,
    )(ids_flat, w)


if __name__ == "__main__":
    # Module config: embed_dim == vocab_size (weight is eye(embed_dim), frozen).
    embed_dim = 128
    vocab_size = 128
    seq = 8
    batch = 8

    key = jax.random.PRNGKey(0)
    x = jax.random.randint(key, (seq, batch), 0, vocab_size, dtype=jnp.int32)

    # Deterministic parameter init matching the module's __init__.
    w = jnp.eye(vocab_size, embed_dim, dtype=jnp.float32)

    out = bow_encoder(x, w)
    out = jax.block_until_ready(out)

    # Pure-JAX reference: embedding lookup then sum over dim 0.
    ref = jnp.take(w, x, axis=0).sum(axis=0)
    assert out.shape == (batch, embed_dim)
    assert jnp.allclose(out, ref), "mismatch vs reference"

    print("KERNEL_OK")
</pallas_src>

<mosaic_0001>
module attributes {stable_mosaic.version = 11 : i64} {
  func.func @bow_gather_kernel(%arg0: i32, %arg1: i32, %arg2: memref<64xi32, #tpu.memory_space<smem>>, %arg3: memref<128x128xf32, #tpu.memory_space<vmem>>, %arg4: memref<8x128xf32, #tpu.memory_space<vmem>>) attributes {dimension_semantics = [#tpu.dimension_semantics<parallel>, #tpu.dimension_semantics<arbitrary>], iteration_bounds = array<i64: 1, 1>, scalar_prefetch = 1 : i64, scratch_operands = 0 : i64, tpu.core_type = #tpu.core_type<tc>, window_params = [{transform_indices = @transform_0, window_bounds = array<i64: 128, 128>}, {transform_indices = @transform_1, window_bounds = array<i64: 8, 128>}]} {
    %c0_i32 = arith.constant 0 : i32
    %0 = arith.cmpi eq, %arg1, %c0_i32 : i32
    %1 = arith.extui %0 : i1 to i32
    %c0_i32_0 = arith.constant 0 : i32
    %2 = arith.cmpi ne, %1, %c0_i32_0 : i32
    scf.if %2 {
      %cst = arith.constant 0.000000e+00 : f32
      %532 = vector.broadcast %cst : f32 to vector<8x128xf32>
      %c0_386 = arith.constant 0 : index
      %c0_387 = arith.constant 0 : index
      %533 = vector.load %arg4[%c0_386, %c0_387] : memref<8x128xf32, #tpu.memory_space<vmem>>, vector<8x128xf32>
      tpu.vector_store %arg4[%c0_386, %c0_387], %532 {strides = array<i32>} : memref<8x128xf32, #tpu.memory_space<vmem>>, vector<8x128xf32>,
    } else {
    }
    %c64_i32 = arith.constant 64 : i32
    %3 = arith.muli %arg1, %c64_i32 : i32
    %c0_i32_1 = arith.constant 0 : i32
    %c8_i32 = arith.constant 8 : i32
    %4 = arith.muli %c0_i32_1, %c8_i32 : i32
    %5 = arith.addi %3, %4 : i32
    %c0_i32_2 = arith.constant 0 : i32
    %6 = arith.addi %5, %c0_i32_2 : i32
    %7 = arith.index_cast %6 : i32 to index
    %8 = memref.load %arg2[%7] : memref<64xi32, #tpu.memory_space<smem>>
    %9 = arith.index_cast %8 : i32 to index
    %c0 = arith.constant 0 : index
    %10 = vector.load %arg3[%9, %c0] : memref<128x128xf32, #tpu.memory_space<vmem>>, vector<1x128xf32>
    %c0_3 = arith.constant 0 : index
    %c0_4 = arith.constant 0 : index
    %11 = vector.load %arg4[%c0_3, %c0_4] : memref<8x128xf32, #tpu.memory_space<vmem>>, vector<1x128xf32>
    %12 = arith.addf %11, %10 : vector<1x128xf32>
    %c0_5 = arith.constant 0 : index
    %c0_6 = arith.constant 0 : index
    %13 = vector.load %arg4[%c0_5, %c0_6] : memref<8x128xf32, #tpu.memory_space<vmem>>, vector<1x128xf32>
    tpu.vector_store %arg4[%c0_5, %c0_6], %12 {strides = array<i32>} : memref<8x128xf32, #tpu.memory_space<vmem>>, vector<1x128xf32>,
    %c1_i32 = arith.constant 1 : i32
    %14 = arith.addi %5, %c1_i32 : i32
    %15 = arith.index_cast %14 : i32 to index
    %16 = memref.load %arg2[%15] : memref<64xi32, #tpu.memory_space<smem>>
    %17 = arith.index_cast %16 : i32 to index
    %c0_7 = arith.constant 0 : index
    %18 = vector.load %arg3[%17, %c0_7] : memref<128x128xf32, #tpu.memory_space<vmem>>, vector<1x128xf32>
    %c1 = arith.constant 1 : index
    %c0_8 = arith.constant 0 : index
    %19 = vector.load %arg4[%c1, %c0_8] : memref<8x128xf32, #tpu.memory_space<vmem>>, vector<1x128xf32>
    %20 = arith.addf %19, %18 : vector<1x128xf32>
    %c1_9 = arith.constant 1 : index
    %c0_10 = arith.constant 0 : index
    %21 = vector.load %arg4[%c1_9, %c0_10] : memref<8x128xf32, #tpu.memory_space<vmem>>, vector<1x128xf32>
    tpu.vector_store %arg4[%c1_9, %c0_10], %20 {strides = array<i32>} : memref<8x128xf32, #tpu.memory_space<vmem>>, vector<1x128xf32>,
    %c2_i32 = arith.constant 2 : i32
    %22 = arith.addi %5, %c2_i32 : i32
    %23 = arith.index_cast %22 : i32 to index
    %24 = memref.load %arg2[%23] : memref<64xi32, #tpu.memory_space<smem>>
    %25 = arith.index_cast %24 : i32 to index
    %c0_11 = arith.constant 0 : index
    %26 = vector.load %arg3[%25, %c0_11] : memref<128x128xf32, #tpu.memory_space<vmem>>, vector<1x128xf32>
    %c2 = arith.constant 2 : index
    %c0_12 = arith.constant 0 : index
    %27 = vector.load %arg4[%c2, %c0_12] : memref<8x128xf32, #tpu.memory_space<vmem>>, vector<1x128xf32>
    %28 = arith.addf %27, %26 : vector<1x128xf32>
    %c2_13 = arith.constant 2 : index
    %c0_14 = arith.constant 0 : index
    %29 = vector.load %arg4[%c2_13, %c0_14] : memref<8x128xf32, #tpu.memory_space<vmem>>, vector<1x128xf32>
    tpu.vector_store %arg4[%c2_13, %c0_14], %28 {strides = array<i32>} : memref<8x128xf32, #tpu.memory_space<vmem>>, vector<1x128xf32>,
    %c3_i32 = arith.constant 3 : i32
    %30 = arith.addi %5, %c3_i32 : i32
    %31 = arith.index_cast %30 : i32 to index
    %32 = memref.load %arg2[%31] : memref<64xi32, #tpu.memory_space<smem>>
    %33 = arith.index_cast %32 : i32 to index
    %c0_15 = arith.constant 0 : index
    %34 = vector.load %arg3[%33, %c0_15] : memref<128x128xf32, #tpu.memory_space<vmem>>, vector<1x128xf32>
    %c3 = arith.constant 3 : index
    %c0_16 = arith.constant 0 : index
    %35 = vector.load %arg4[%c3, %c0_16] : memref<8x128xf32, #tpu.memory_space<vmem>>, vector<1x128xf32>
    %36 = arith.addf %35, %34 : vector<1x128xf32>
    %c3_17 = arith.constant 3 : index
    %c0_18 = arith.constant 0 : index
    %37 = vector.load %arg4[%c3_17, %c0_18] : memref<8x128xf32, #tpu.memory_space<vmem>>, vector<1x128xf32>
    tpu.vector_store %arg4[%c3_17, %c0_18], %36 {strides = array<i32>} : memref<8x128xf32, #tpu.memory_space<vmem>>, vector<1x128xf32>,
    %c4_i32 = arith.constant 4 : i32
    %38 = arith.addi %5, %c4_i32 : i32
    %39 = arith.index_cast %38 : i32 to index
    %40 = memref.load %arg2[%39] : memref<64xi32, #tpu.memory_space<smem>>
    %41 = arith.index_cast %40 : i32 to index
    %c0_19 = arith.constant 0 : index
    %42 = vector.load %arg3[%41, %c0_19] : memref<128x128xf32, #tpu.memory_space<vmem>>, vector<1x128xf32>
    %c4 = arith.constant 4 : index
    %c0_20 = arith.constant 0 : index
    %43 = vector.load %arg4[%c4, %c0_20] : memref<8x128xf32, #tpu.memory_space<vmem>>, vector<1x128xf32>
    %44 = arith.addf %43, %42 : vector<1x128xf32>
    %c4_21 = arith.constant 4 : index
    %c0_22 = arith.constant 0 : index
    %45 = vector.load %arg4[%c4_21, %c0_22] : memref<8x128xf32, #tpu.memory_space<vmem>>, vector<1x128xf32>
    tpu.vector_store %arg4[%c4_21, %c0_22], %44 {strides = array<i32>} : memref<8x128xf32, #tpu.memory_space<vmem>>, vector<1x128xf32>,
    %c5_i32 = arith.constant 5 : i32
    %46 = arith.addi %5, %c5_i32 : i32
    %47 = arith.index_cast %46 : i32 to index
    %48 = memref.load %arg2[%47] : memref<64xi32, #tpu.memory_space<smem>>
    %49 = arith.index_cast %48 : i32 to index
    %c0_23 = arith.constant 0 : index
    %50 = vector.load %arg3[%49, %c0_23] : memref<128x128xf32, #tpu.memory_space<vmem>>, vector<1x128xf32>
    %c5 = arith.constant 5 : index
    %c0_24 = arith.constant 0 : index
    %51 = vector.load %arg4[%c5, %c0_24] : memref<8x128xf32, #tpu.memory_space<vmem>>, vector<1x128xf32>
    %52 = arith.addf %51, %50 : vector<1x128xf32>
    %c5_25 = arith.constant 5 : index
    %c0_26 = arith.constant 0 : index
    %53 = vector.load %arg4[%c5_25, %c0_26] : memref<8x128xf32, #tpu.memory_space<vmem>>, vector<1x128xf32>
    tpu.vector_store %arg4[%c5_25, %c0_26], %52 {strides = array<i32>} : memref<8x128xf32, #tpu.memory_space<vmem>>, vector<1x128xf32>,
    %c6_i32 = arith.constant 6 : i32
    %54 = arith.addi %5, %c6_i32 : i32
    %55 = arith.index_cast %54 : i32 to index
    %56 = memref.load %arg2[%55] : memref<64xi32, #tpu.memory_space<smem>>
    %57 = arith.index_cast %56 : i32 to index
    %c0_27 = arith.constant 0 : index
    %58 = vector.load %arg3[%57, %c0_27] : memref<128x128xf32, #tpu.memory_space<vmem>>, vector<1x128xf32>
    %c6 = arith.constant 6 : index
    %c0_28 = arith.constant 0 : index
    %59 = vector.load %arg4[%c6, %c0_28] : memref<8x128xf32, #tpu.memory_space<vmem>>, vector<1x128xf32>
    %60 = arith.addf %59, %58 : vector<1x128xf32>
    %c6_29 = arith.constant 6 : index
    %c0_30 = arith.constant 0 : index
    %61 = vector.load %arg4[%c6_29, %c0_30] : memref<8x128xf32, #tpu.memory_space<vmem>>, vector<1x128xf32>
    tpu.vector_store %arg4[%c6_29, %c0_30], %60 {strides = array<i32>} : memref<8x128xf32, #tpu.memory_space<vmem>>, vector<1x128xf32>,
    %c7_i32 = arith.constant 7 : i32
    %62 = arith.addi %5, %c7_i32 : i32
    %63 = arith.index_cast %62 : i32 to index
    %64 = memref.load %arg2[%63] : memref<64xi32, #tpu.memory_space<smem>>
    %65 = arith.index_cast %64 : i32 to index
    %c0_31 = arith.constant 0 : index
    %66 = vector.load %arg3[%65, %c0_31] : memref<128x128xf32, #tpu.memory_space<vmem>>, vector<1x128xf32>
    %c7 = arith.constant 7 : index
    %c0_32 = arith.constant 0 : index
    %67 = vector.load %arg4[%c7, %c0_32] : memref<8x128xf32, #tpu.memory_space<vmem>>, vector<1x128xf32>
    %68 = arith.addf %67, %66 : vector<1x128xf32>
    %c7_33 = arith.constant 7 : index
    %c0_34 = arith.constant 0 : index
    %69 = vector.load %arg4[%c7_33, %c0_34] : memref<8x128xf32, #tpu.memory_space<vmem>>, vector<1x128xf32>
    tpu.vector_store %arg4[%c7_33, %c0_34], %68 {strides = array<i32>} : memref<8x128xf32, #tpu.memory_space<vmem>>, vector<1x128xf32>,
    %c1_i32_35 = arith.constant 1 : i32
    %c8_i32_36 = arith.constant 8 : i32
    %70 = arith.muli %c1_i32_35, %c8_i32_36 : i32
    %71 = arith.addi %3, %70 : i32
    %c0_i32_37 = arith.constant 0 : i32
    %72 = arith.addi %71, %c0_i32_37 : i32
    %73 = arith.index_cast %72 : i32 to index
    %74 = memref.load %arg2[%73] : memref<64xi32, #tpu.memory_space<smem>>
    %75 = arith.index_cast %74 : i32 to index
    %c0_38 = arith.constant 0 : index
    %76 = vector.load %arg3[%75, %c0_38] : memref<128x128xf32, #tpu.memory_space<vmem>>, vector<1x128xf32>
    %c0_39 = arith.constant 0 : index
    %c0_40 = arith.constant 0 : index
    %77 = vector.load %arg4[%c0_39, %c0_40] : memref<8x128xf32, #tpu.memory_space<vmem>>, vector<1x128xf32>
    %78 = arith.addf %77, %76 : vector<1x128xf32>
    %c0_41 = arith.constant 0 : index
    %c0_42 = arith.constant 0 : index
    %79 = vector.load %arg4[%c0_41, %c0_42] : memref<8x128xf32, #tpu.memory_space<vmem>>, vector<1x128xf32>
    tpu.vector_store %arg4[%c0_41, %c0_42], %78 {strides = array<i32>} : memref<8x128xf32, #tpu.memory_space<vmem>>, vector<1x128xf32>,
    %c1_i32_43 = arith.constant 1 : i32
    %80 = arith.addi %71, %c1_i32_43 : i32
    %81 = arith.index_cast %80 : i32 to index
    %82 = memref.load %arg2[%81] : memref<64xi32, #tpu.memory_space<smem>>
    %83 = arith.index_cast %82 : i32 to index
    %c0_44 = arith.constant 0 : index
    %84 = vector.load %arg3[%83, %c0_44] : memref<128x128xf32, #tpu.memory_space<vmem>>, vector<1x128xf32>
    %c1_45 = arith.constant 1 : index
    %c0_46 = arith.constant 0 : index
    %85 = vector.load %arg4[%c1_45, %c0_46] : memref<8x128xf32, #tpu.memory_space<vmem>>, vector<1x128xf32>
    %86 = arith.addf %85, %84 : vector<1x128xf32>
    %c1_47 = arith.constant 1 : index
    %c0_48 = arith.constant 0 : index
    %87 = vector.load %arg4[%c1_47, %c0_48] : memref<8x128xf32, #tpu.memory_space<vmem>>, vector<1x128xf32>
    tpu.vector_store %arg4[%c1_47, %c0_48], %86 {strides = array<i32>} : memref<8x128xf32, #tpu.memory_space<vmem>>, vector<1x128xf32>,
    %c2_i32_49 = arith.constant 2 : i32
    %88 = arith.addi %71, %c2_i32_49 : i32
    %89 = arith.index_cast %88 : i32 to index
    %90 = memref.load %arg2[%89] : memref<64xi32, #tpu.memory_space<smem>>
    %91 = arith.index_cast %90 : i32 to index
    %c0_50 = arith.constant 0 : index
    %92 = vector.load %arg3[%91, %c0_50] : memref<128x128xf32, #tpu.memory_space<vmem>>, vector<1x128xf32>
    %c2_51 = arith.constant 2 : index
    %c0_52 = arith.constant 0 : index
    %93 = vector.load %arg4[%c2_51, %c0_52] : memref<8x128xf32, #tpu.memory_space<vmem>>, vector<1x128xf32>
    %94 = arith.addf %93, %92 : vector<1x128xf32>
    %c2_53 = arith.constant 2 : index
    %c0_54 = arith.constant 0 : index
    %95 = vector.load %arg4[%c2_53, %c0_54] : memref<8x128xf32, #tpu.memory_space<vmem>>, vector<1x128xf32>
    tpu.vector_store %arg4[%c2_53, %c0_54], %94 {strides = array<i32>} : memref<8x128xf32, #tpu.memory_space<vmem>>, vector<1x128xf32>,
    %c3_i32_55 = arith.constant 3 : i32
    %96 = arith.addi %71, %c3_i32_55 : i32
    %97 = arith.index_cast %96 : i32 to index
    %98 = memref.load %arg2[%97] : memref<64xi32, #tpu.memory_space<smem>>
    %99 = arith.index_cast %98 : i32 to index
    %c0_56 = arith.constant 0 : index
    %100 = vector.load %arg3[%99, %c0_56] : memref<128x128xf32, #tpu.memory_space<vmem>>, vector<1x128xf32>
    %c3_57 = arith.constant 3 : index
    %c0_58 = arith.constant 0 : index
    %101 = vector.load %arg4[%c3_57, %c0_58] : memref<8x128xf32, #tpu.memory_space<vmem>>, vector<1x128xf32>
    %102 = arith.addf %101, %100 : vector<1x128xf32>
    %c3_59 = arith.constant 3 : index
    %c0_60 = arith.constant 0 : index
    %103 = vector.load %arg4[%c3_59, %c0_60] : memref<8x128xf32, #tpu.memory_space<vmem>>, vector<1x128xf32>
    tpu.vector_store %arg4[%c3_59, %c0_60], %102 {strides = array<i32>} : memref<8x128xf32, #tpu.memory_space<vmem>>, vector<1x128xf32>,
    %c4_i32_61 = arith.constant 4 : i32
    %104 = arith.addi %71, %c4_i32_61 : i32
    %105 = arith.index_cast %104 : i32 to index
    %106 = memref.load %arg2[%105] : memref<64xi32, #tpu.memory_space<smem>>
    %107 = arith.index_cast %106 : i32 to index
    %c0_62 = arith.constant 0 : index
    %108 = vector.load %arg3[%107, %c0_62] : memref<128x128xf32, #tpu.memory_space<vmem>>, vector<1x128xf32>
    %c4_63 = arith.constant 4 : index
    %c0_64 = arith.constant 0 : index
    %109 = vector.load %arg4[%c4_63, %c0_64] : memref<8x128xf32, #tpu.memory_space<vmem>>, vector<1x128xf32>
    %110 = arith.addf %109, %108 : vector<1x128xf32>
    %c4_65 = arith.constant 4 : index
    %c0_66 = arith.constant 0 : index
    %111 = vector.load %arg4[%c4_65, %c0_66] : memref<8x128xf32, #tpu.memory_space<vmem>>, vector<1x128xf32>
    tpu.vector_store %arg4[%c4_65, %c0_66], %110 {strides = array<i32>} : memref<8x128xf32, #tpu.memory_space<vmem>>, vector<1x128xf32>,
    %c5_i32_67 = arith.constant 5 : i32
    %112 = arith.addi %71, %c5_i32_67 : i32
    %113 = arith.index_cast %112 : i32 to index
    %114 = memref.load %arg2[%113] : memref<64xi32, #tpu.memory_space<smem>>
    %115 = arith.index_cast %114 : i32 to index
    %c0_68 = arith.constant 0 : index
    %116 = vector.load %arg3[%115, %c0_68] : memref<128x128xf32, #tpu.memory_space<vmem>>, vector<1x128xf32>
    %c5_69 = arith.constant 5 : index
    %c0_70 = arith.constant 0 : index
    %117 = vector.load %arg4[%c5_69, %c0_70] : memref<8x128xf32, #tpu.memory_space<vmem>>, vector<1x128xf32>
    %118 = arith.addf %117, %116 : vector<1x128xf32>
    %c5_71 = arith.constant 5 : index
    %c0_72 = arith.constant 0 : index
    %119 = vector.load %arg4[%c5_71, %c0_72] : memref<8x128xf32, #tpu.memory_space<vmem>>, vector<1x128xf32>
    tpu.vector_store %arg4[%c5_71, %c0_72], %118 {strides = array<i32>} : memref<8x128xf32, #tpu.memory_space<vmem>>, vector<1x128xf32>,
    %c6_i32_73 = arith.constant 6 : i32
    %120 = arith.addi %71, %c6_i32_73 : i32
    %121 = arith.index_cast %120 : i32 to index
    %122 = memref.load %arg2[%121] : memref<64xi32, #tpu.memory_space<smem>>
    %123 = arith.index_cast %122 : i32 to index
    %c0_74 = arith.constant 0 : index
    %124 = vector.load %arg3[%123, %c0_74] : memref<128x128xf32, #tpu.memory_space<vmem>>, vector<1x128xf32>
    %c6_75 = arith.constant 6 : index
    %c0_76 = arith.constant 0 : index
    %125 = vector.load %arg4[%c6_75, %c0_76] : memref<8x128xf32, #tpu.memory_space<vmem>>, vector<1x128xf32>
    %126 = arith.addf %125, %124 : vector<1x128xf32>
    %c6_77 = arith.constant 6 : index
    %c0_78 = arith.constant 0 : index
    %127 = vector.load %arg4[%c6_77, %c0_78] : memref<8x128xf32, #tpu.memory_space<vmem>>, vector<1x128xf32>
    tpu.vector_store %arg4[%c6_77, %c0_78], %126 {strides = array<i32>} : memref<8x128xf32, #tpu.memory_space<vmem>>, vector<1x128xf32>,
    %c7_i32_79 = arith.constant 7 : i32
    %128 = arith.addi %71, %c7_i32_79 : i32
    %129 = arith.index_cast %128 : i32 to index
    %130 = memref.load %arg2[%129] : memref<64xi32, #tpu.memory_space<smem>>
    %131 = arith.index_cast %130 : i32 to index
    %c0_80 = arith.constant 0 : index
    %132 = vector.load %arg3[%131, %c0_80] : memref<128x128xf32, #tpu.memory_space<vmem>>, vector<1x128xf32>
    %c7_81 = arith.constant 7 : index
    %c0_82 = arith.constant 0 : index
    %133 = vector.load %arg4[%c7_81, %c0_82] : memref<8x128xf32, #tpu.memory_space<vmem>>, vector<1x128xf32>
    %134 = arith.addf %133, %132 : vector<1x128xf32>
    %c7_83 = arith.constant 7 : index
    %c0_84 = arith.constant 0 : index
    %135 = vector.load %arg4[%c7_83, %c0_84] : memref<8x128xf32, #tpu.memory_space<vmem>>, vector<1x128xf32>
    tpu.vector_store %arg4[%c7_83, %c0_84], %134 {strides = array<i32>} : memref<8x128xf32, #tpu.memory_space<vmem>>, vector<1x128xf32>,
    %c2_i32_85 = arith.constant 2 : i32
    %c8_i32_86 = arith.constant 8 : i32
    %136 = arith.muli %c2_i32_85, %c8_i32_86 : i32
    %137 = arith.addi %3, %136 : i32
    %c0_i32_87 = arith.constant 0 : i32
    %138 = arith.addi %137, %c0_i32_87 : i32
    %139 = arith.index_cast %138 : i32 to index
    %140 = memref.load %arg2[%139] : memref<64xi32, #tpu.memory_space<smem>>
    %141 = arith.index_cast %140 : i32 to index
    %c0_88 = arith.constant 0 : index
    %142 = vector.load %arg3[%141, %c0_88] : memref<128x128xf32, #tpu.memory_space<vmem>>, vector<1x128xf32>
    %c0_89 = arith.constant 0 : index
    %c0_90 = arith.constant 0 : index
    %143 = vector.load %arg4[%c0_89, %c0_90] : memref<8x128xf32, #tpu.memory_space<vmem>>, vector<1x128xf32>
    %144 = arith.addf %143, %142 : vector<1x128xf32>
    %c0_91 = arith.constant 0 : index
    %c0_92 = arith.constant 0 : index
    %145 = vector.load %arg4[%c0_91, %c0_92] : memref<8x128xf32, #tpu.memory_space<vmem>>, vector<1x128xf32>
    tpu.vector_store %arg4[%c0_91, %c0_92], %144 {strides = array<i32>} : memref<8x128xf32, #tpu.memory_space<vmem>>, vector<1x128xf32>,
    %c1_i32_93 = arith.constant 1 : i32
    %146 = arith.addi %137, %c1_i32_93 : i32
    %147 = arith.index_cast %146 : i32 to index
    %148 = memref.load %arg2[%147] : memref<64xi32, #tpu.memory_space<smem>>
    %149 = arith.index_cast %148 : i32 to index
    %c0_94 = arith.constant 0 : index
    %150 = vector.load %arg3[%149, %c0_94] : memref<128x128xf32, #tpu.memory_space<vmem>>, vector<1x128xf32>
    %c1_95 = arith.constant 1 : index
    %c0_96 = arith.constant 0 : index
    %151 = vector.load %arg4[%c1_95, %c0_96] : memref<8x128xf32, #tpu.memory_space<vmem>>, vector<1x128xf32>
    %152 = arith.addf %151, %150 : vector<1x128xf32>
    %c1_97 = arith.constant 1 : index
    %c0_98 = arith.constant 0 : index
    %153 = vector.load %arg4[%c1_97, %c0_98] : memref<8x128xf32, #tpu.memory_space<vmem>>, vector<1x128xf32>
    tpu.vector_store %arg4[%c1_97, %c0_98], %152 {strides = array<i32>} : memref<8x128xf32, #tpu.memory_space<vmem>>, vector<1x128xf32>,
    %c2_i32_99 = arith.constant 2 : i32
    %154 = arith.addi %137, %c2_i32_99 : i32
    %155 = arith.index_cast %154 : i32 to index
    %156 = memref.load %arg2[%155] : memref<64xi32, #tpu.memory_space<smem>>
    %157 = arith.index_cast %156 : i32 to index
    %c0_100 = arith.constant 0 : index
    %158 = vector.load %arg3[%157, %c0_100] : memref<128x128xf32, #tpu.memory_space<vmem>>, vector<1x128xf32>
    %c2_101 = arith.constant 2 : index
    %c0_102 = arith.constant 0 : index
    %159 = vector.load %arg4[%c2_101, %c0_102] : memref<8x128xf32, #tpu.memory_space<vmem>>, vector<1x128xf32>
    %160 = arith.addf %159, %158 : vector<1x128xf32>
    %c2_103 = arith.constant 2 : index
    %c0_104 = arith.constant 0 : index
    %161 = vector.load %arg4[%c2_103, %c0_104] : memref<8x128xf32, #tpu.memory_space<vmem>>, vector<1x128xf32>
    tpu.vector_store %arg4[%c2_103, %c0_104], %160 {strides = array<i32>} : memref<8x128xf32, #tpu.memory_space<vmem>>, vector<1x128xf32>,
    %c3_i32_105 = arith.constant 3 : i32
    %162 = arith.addi %137, %c3_i32_105 : i32
    %163 = arith.index_cast %162 : i32 to index
    %164 = memref.load %arg2[%163] : memref<64xi32, #tpu.memory_space<smem>>
    %165 = arith.index_cast %164 : i32 to index
    %c0_106 = arith.constant 0 : index
    %166 = vector.load %arg3[%165, %c0_106] : memref<128x128xf32, #tpu.memory_space<vmem>>, vector<1x128xf32>
    %c3_107 = arith.constant 3 : index
    %c0_108 = arith.constant 0 : index
    %167 = vector.load %arg4[%c3_107, %c0_108] : memref<8x128xf32, #tpu.memory_space<vmem>>, vector<1x128xf32>
    %168 = arith.addf %167, %166 : vector<1x128xf32>
    %c3_109 = arith.constant 3 : index
    %c0_110 = arith.constant 0 : index
    %169 = vector.load %arg4[%c3_109, %c0_110] : memref<8x128xf32, #tpu.memory_space<vmem>>, vector<1x128xf32>
    tpu.vector_store %arg4[%c3_109, %c0_110], %168 {strides = array<i32>} : memref<8x128xf32, #tpu.memory_space<vmem>>, vector<1x128xf32>,
    %c4_i32_111 = arith.constant 4 : i32
    %170 = arith.addi %137, %c4_i32_111 : i32
    %171 = arith.index_cast %170 : i32 to index
    %172 = memref.load %arg2[%171] : memref<64xi32, #tpu.memory_space<smem>>
    %173 = arith.index_cast %172 : i32 to index
    %c0_112 = arith.constant 0 : index
    %174 = vector.load %arg3[%173, %c0_112] : memref<128x128xf32, #tpu.memory_space<vmem>>, vector<1x128xf32>
    %c4_113 = arith.constant 4 : index
    %c0_114 = arith.constant 0 : index
    %175 = vector.load %arg4[%c4_113, %c0_114] : memref<8x128xf32, #tpu.memory_space<vmem>>, vector<1x128xf32>
    %176 = arith.addf %175, %174 : vector<1x128xf32>
    %c4_115 = arith.constant 4 : index
    %c0_116 = arith.constant 0 : index
    %177 = vector.load %arg4[%c4_115, %c0_116] : memref<8x128xf32, #tpu.memory_space<vmem>>, vector<1x128xf32>
    tpu.vector_store %arg4[%c4_115, %c0_116], %176 {strides = array<i32>} : memref<8x128xf32, #tpu.memory_space<vmem>>, vector<1x128xf32>,
    %c5_i32_117 = arith.constant 5 : i32
    %178 = arith.addi %137, %c5_i32_117 : i32
    %179 = arith.index_cast %178 : i32 to index
    %180 = memref.load %arg2[%179] : memref<64xi32, #tpu.memory_space<smem>>
    %181 = arith.index_cast %180 : i32 to index
    %c0_118 = arith.constant 0 : index
    %182 = vector.load %arg3[%181, %c0_118] : memref<128x128xf32, #tpu.memory_space<vmem>>, vector<1x128xf32>
    %c5_119 = arith.constant 5 : index
    %c0_120 = arith.constant 0 : index
    %183 = vector.load %arg4[%c5_119, %c0_120] : memref<8x128xf32, #tpu.memory_space<vmem>>, vector<1x128xf32>
    %184 = arith.addf %183, %182 : vector<1x128xf32>
    %c5_121 = arith.constant 5 : index
    %c0_122 = arith.constant 0 : index
    %185 = vector.load %arg4[%c5_121, %c0_122] : memref<8x128xf32, #tpu.memory_space<vmem>>, vector<1x128xf32>
    tpu.vector_store %arg4[%c5_121, %c0_122], %184 {strides = array<i32>} : memref<8x128xf32, #tpu.memory_space<vmem>>, vector<1x128xf32>,
    %c6_i32_123 = arith.constant 6 : i32
    %186 = arith.addi %137, %c6_i32_123 : i32
    %187 = arith.index_cast %186 : i32 to index
    %188 = memref.load %arg2[%187] : memref<64xi32, #tpu.memory_space<smem>>
    %189 = arith.index_cast %188 : i32 to index
    %c0_124 = arith.constant 0 : index
    %190 = vector.load %arg3[%189, %c0_124] : memref<128x128xf32, #tpu.memory_space<vmem>>, vector<1x128xf32>
    %c6_125 = arith.constant 6 : index
    %c0_126 = arith.constant 0 : index
    %191 = vector.load %arg4[%c6_125, %c0_126] : memref<8x128xf32, #tpu.memory_space<vmem>>, vector<1x128xf32>
    %192 = arith.addf %191, %190 : vector<1x128xf32>
    %c6_127 = arith.constant 6 : index
    %c0_128 = arith.constant 0 : index
    %193 = vector.load %arg4[%c6_127, %c0_128] : memref<8x128xf32, #tpu.memory_space<vmem>>, vector<1x128xf32>
    tpu.vector_store %arg4[%c6_127, %c0_128], %192 {strides = array<i32>} : memref<8x128xf32, #tpu.memory_space<vmem>>, vector<1x128xf32>,
    %c7_i32_129 = arith.constant 7 : i32
    %194 = arith.addi %137, %c7_i32_129 : i32
    %195 = arith.index_cast %194 : i32 to index
    %196 = memref.load %arg2[%195] : memref<64xi32, #tpu.memory_space<smem>>
    %197 = arith.index_cast %196 : i32 to index
    %c0_130 = arith.constant 0 : index
    %198 = vector.load %arg3[%197, %c0_130] : memref<128x128xf32, #tpu.memory_space<vmem>>, vector<1x128xf32>
    %c7_131 = arith.constant 7 : index
    %c0_132 = arith.constant 0 : index
    %199 = vector.load %arg4[%c7_131, %c0_132] : memref<8x128xf32, #tpu.memory_space<vmem>>, vector<1x128xf32>
    %200 = arith.addf %199, %198 : vector<1x128xf32>
    %c7_133 = arith.constant 7 : index
    %c0_134 = arith.constant 0 : index
    %201 = vector.load %arg4[%c7_133, %c0_134] : memref<8x128xf32, #tpu.memory_space<vmem>>, vector<1x128xf32>
    tpu.vector_store %arg4[%c7_133, %c0_134], %200 {strides = array<i32>} : memref<8x128xf32, #tpu.memory_space<vmem>>, vector<1x128xf32>,
    %c3_i32_135 = arith.constant 3 : i32
    %c8_i32_136 = arith.constant 8 : i32
    %202 = arith.muli %c3_i32_135, %c8_i32_136 : i32
    %203 = arith.addi %3, %202 : i32
    %c0_i32_137 = arith.constant 0 : i32
    %204 = arith.addi %203, %c0_i32_137 : i32
    %205 = arith.index_cast %204 : i32 to index
    %206 = memref.load %arg2[%205] : memref<64xi32, #tpu.memory_space<smem>>
    %207 = arith.index_cast %206 : i32 to index
    %c0_138 = arith.constant 0 : index
    %208 = vector.load %arg3[%207, %c0_138] : memref<128x128xf32, #tpu.memory_space<vmem>>, vector<1x128xf32>
    %c0_139 = arith.constant 0 : index
    %c0_140 = arith.constant 0 : index
    %209 = vector.load %arg4[%c0_139, %c0_140] : memref<8x128xf32, #tpu.memory_space<vmem>>, vector<1x128xf32>
    %210 = arith.addf %209, %208 : vector<1x128xf32>
    %c0_141 = arith.constant 0 : index
    %c0_142 = arith.constant 0 : index
    %211 = vector.load %arg4[%c0_141, %c0_142] : memref<8x128xf32, #tpu.memory_space<vmem>>, vector<1x128xf32>
    tpu.vector_store %arg4[%c0_141, %c0_142], %210 {strides = array<i32>} : memref<8x128xf32, #tpu.memory_space<vmem>>, vector<1x128xf32>,
    %c1_i32_143 = arith.constant 1 : i32
    %212 = arith.addi %203, %c1_i32_143 : i32
    %213 = arith.index_cast %212 : i32 to index
    %214 = memref.load %arg2[%213] : memref<64xi32, #tpu.memory_space<smem>>
    %215 = arith.index_cast %214 : i32 to index
    %c0_144 = arith.constant 0 : index
    %216 = vector.load %arg3[%215, %c0_144] : memref<128x128xf32, #tpu.memory_space<vmem>>, vector<1x128xf32>
    %c1_145 = arith.constant 1 : index
    %c0_146 = arith.constant 0 : index
    %217 = vector.load %arg4[%c1_145, %c0_146] : memref<8x128xf32, #tpu.memory_space<vmem>>, vector<1x128xf32>
    %218 = arith.addf %217, %216 : vector<1x128xf32>
    %c1_147 = arith.constant 1 : index
    %c0_148 = arith.constant 0 : index
    %219 = vector.load %arg4[%c1_147, %c0_148] : memref<8x128xf32, #tpu.memory_space<vmem>>, vector<1x128xf32>
    tpu.vector_store %arg4[%c1_147, %c0_148], %218 {strides = array<i32>} : memref<8x128xf32, #tpu.memory_space<vmem>>, vector<1x128xf32>,
    %c2_i32_149 = arith.constant 2 : i32
    %220 = arith.addi %203, %c2_i32_149 : i32
    %221 = arith.index_cast %220 : i32 to index
    %222 = memref.load %arg2[%221] : memref<64xi32, #tpu.memory_space<smem>>
    %223 = arith.index_cast %222 : i32 to index
    %c0_150 = arith.constant 0 : index
    %224 = vector.load %arg3[%223, %c0_150] : memref<128x128xf32, #tpu.memory_space<vmem>>, vector<1x128xf32>
    %c2_151 = arith.constant 2 : index
    %c0_152 = arith.constant 0 : index
    %225 = vector.load %arg4[%c2_151, %c0_152] : memref<8x128xf32, #tpu.memory_space<vmem>>, vector<1x128xf32>
    %226 = arith.addf %225, %224 : vector<1x128xf32>
    %c2_153 = arith.constant 2 : index
    %c0_154 = arith.constant 0 : index
    %227 = vector.load %arg4[%c2_153, %c0_154] : memref<8x128xf32, #tpu.memory_space<vmem>>, vector<1x128xf32>
    tpu.vector_store %arg4[%c2_153, %c0_154], %226 {strides = array<i32>} : memref<8x128xf32, #tpu.memory_space<vmem>>, vector<1x128xf32>,
    %c3_i32_155 = arith.constant 3 : i32
    %228 = arith.addi %203, %c3_i32_155 : i32
    %229 = arith.index_cast %228 : i32 to index
    %230 = memref.load %arg2[%229] : memref<64xi32, #tpu.memory_space<smem>>
    %231 = arith.index_cast %230 : i32 to index
    %c0_156 = arith.constant 0 : index
    %232 = vector.load %arg3[%231, %c0_156] : memref<128x128xf32, #tpu.memory_space<vmem>>, vector<1x128xf32>
    %c3_157 = arith.constant 3 : index
    %c0_158 = arith.constant 0 : index
    %233 = vector.load %arg4[%c3_157, %c0_158] : memref<8x128xf32, #tpu.memory_space<vmem>>, vector<1x128xf32>
    %234 = arith.addf %233, %232 : vector<1x128xf32>
    %c3_159 = arith.constant 3 : index
    %c0_160 = arith.constant 0 : index
    %235 = vector.load %arg4[%c3_159, %c0_160] : memref<8x128xf32, #tpu.memory_space<vmem>>, vector<1x128xf32>
    tpu.vector_store %arg4[%c3_159, %c0_160], %234 {strides = array<i32>} : memref<8x128xf32, #tpu.memory_space<vmem>>, vector<1x128xf32>,
    %c4_i32_161 = arith.constant 4 : i32
    %236 = arith.addi %203, %c4_i32_161 : i32
    %237 = arith.index_cast %236 : i32 to index
    %238 = memref.load %arg2[%237] : memref<64xi32, #tpu.memory_space<smem>>
    %239 = arith.index_cast %238 : i32 to index
    %c0_162 = arith.constant 0 : index
    %240 = vector.load %arg3[%239, %c0_162] : memref<128x128xf32, #tpu.memory_space<vmem>>, vector<1x128xf32>
    %c4_163 = arith.constant 4 : index
    %c0_164 = arith.constant 0 : index
    %241 = vector.load %arg4[%c4_163, %c0_164] : memref<8x128xf32, #tpu.memory_space<vmem>>, vector<1x128xf32>
    %242 = arith.addf %241, %240 : vector<1x128xf32>
    %c4_165 = arith.constant 4 : index
    %c0_166 = arith.constant 0 : index
    %243 = vector.load %arg4[%c4_165, %c0_166] : memref<8x128xf32, #tpu.memory_space<vmem>>, vector<1x128xf32>
    tpu.vector_store %arg4[%c4_165, %c0_166], %242 {strides = array<i32>} : memref<8x128xf32, #tpu.memory_space<vmem>>, vector<1x128xf32>,
    %c5_i32_167 = arith.constant 5 : i32
    %244 = arith.addi %203, %c5_i32_167 : i32
    %245 = arith.index_cast %244 : i32 to index
    %246 = memref.load %arg2[%245] : memref<64xi32, #tpu.memory_space<smem>>
    %247 = arith.index_cast %246 : i32 to index
    %c0_168 = arith.constant 0 : index
    %248 = vector.load %arg3[%247, %c0_168] : memref<128x128xf32, #tpu.memory_space<vmem>>, vector<1x128xf32>
    %c5_169 = arith.constant 5 : index
    %c0_170 = arith.constant 0 : index
    %249 = vector.load %arg4[%c5_169, %c0_170] : memref<8x128xf32, #tpu.memory_space<vmem>>, vector<1x128xf32>
    %250 = arith.addf %249, %248 : vector<1x128xf32>
    %c5_171 = arith.constant 5 : index
    %c0_172 = arith.constant 0 : index
    %251 = vector.load %arg4[%c5_171, %c0_172] : memref<8x128xf32, #tpu.memory_space<vmem>>, vector<1x128xf32>
    tpu.vector_store %arg4[%c5_171, %c0_172], %250 {strides = array<i32>} : memref<8x128xf32, #tpu.memory_space<vmem>>, vector<1x128xf32>,
    %c6_i32_173 = arith.constant 6 : i32
    %252 = arith.addi %203, %c6_i32_173 : i32
    %253 = arith.index_cast %252 : i32 to index
    %254 = memref.load %arg2[%253] : memref<64xi32, #tpu.memory_space<smem>>
    %255 = arith.index_cast %254 : i32 to index
    %c0_174 = arith.constant 0 : index
    %256 = vector.load %arg3[%255, %c0_174] : memref<128x128xf32, #tpu.memory_space<vmem>>, vector<1x128xf32>
    %c6_175 = arith.constant 6 : index
    %c0_176 = arith.constant 0 : index
    %257 = vector.load %arg4[%c6_175, %c0_176] : memref<8x128xf32, #tpu.memory_space<vmem>>, vector<1x128xf32>
    %258 = arith.addf %257, %256 : vector<1x128xf32>
    %c6_177 = arith.constant 6 : index
    %c0_178 = arith.constant 0 : index
    %259 = vector.load %arg4[%c6_177, %c0_178] : memref<8x128xf32, #tpu.memory_space<vmem>>, vector<1x128xf32>
    tpu.vector_store %arg4[%c6_177, %c0_178], %258 {strides = array<i32>} : memref<8x128xf32, #tpu.memory_space<vmem>>, vector<1x128xf32>,
    %c7_i32_179 = arith.constant 7 : i32
    %260 = arith.addi %203, %c7_i32_179 : i32
    %261 = arith.index_cast %260 : i32 to index
    %262 = memref.load %arg2[%261] : memref<64xi32, #tpu.memory_space<smem>>
    %263 = arith.index_cast %262 : i32 to index
    %c0_180 = arith.constant 0 : index
    %264 = vector.load %arg3[%263, %c0_180] : memref<128x128xf32, #tpu.memory_space<vmem>>, vector<1x128xf32>
    %c7_181 = arith.constant 7 : index
    %c0_182 = arith.constant 0 : index
    %265 = vector.load %arg4[%c7_181, %c0_182] : memref<8x128xf32, #tpu.memory_space<vmem>>, vector<1x128xf32>
    %266 = arith.addf %265, %264 : vector<1x128xf32>
    %c7_183 = arith.constant 7 : index
    %c0_184 = arith.constant 0 : index
    %267 = vector.load %arg4[%c7_183, %c0_184] : memref<8x128xf32, #tpu.memory_space<vmem>>, vector<1x128xf32>
    tpu.vector_store %arg4[%c7_183, %c0_184], %266 {strides = array<i32>} : memref<8x128xf32, #tpu.memory_space<vmem>>, vector<1x128xf32>,
    %c4_i32_185 = arith.constant 4 : i32
    %c8_i32_186 = arith.constant 8 : i32
    %268 = arith.muli %c4_i32_185, %c8_i32_186 : i32
    %269 = arith.addi %3, %268 : i32
    %c0_i32_187 = arith.constant 0 : i32
    %270 = arith.addi %269, %c0_i32_187 : i32
    %271 = arith.index_cast %270 : i32 to index
    %272 = memref.load %arg2[%271] : memref<64xi32, #tpu.memory_space<smem>>
    %273 = arith.index_cast %272 : i32 to index
    %c0_188 = arith.constant 0 : index
    %274 = vector.load %arg3[%273, %c0_188] : memref<128x128xf32, #tpu.memory_space<vmem>>, vector<1x128xf32>
    %c0_189 = arith.constant 0 : index
    %c0_190 = arith.constant 0 : index
    %275 = vector.load %arg4[%c0_189, %c0_190] : memref<8x128xf32, #tpu.memory_space<vmem>>, vector<1x128xf32>
    %276 = arith.addf %275, %274 : vector<1x128xf32>
    %c0_191 = arith.constant 0 : index
    %c0_192 = arith.constant 0 : index
    %277 = vector.load %arg4[%c0_191, %c0_192] : memref<8x128xf32, #tpu.memory_space<vmem>>, vector<1x128xf32>
    tpu.vector_store %arg4[%c0_191, %c0_192], %276 {strides = array<i32>} : memref<8x128xf32, #tpu.memory_space<vmem>>, vector<1x128xf32>,
    %c1_i32_193 = arith.constant 1 : i32
    %278 = arith.addi %269, %c1_i32_193 : i32
    %279 = arith.index_cast %278 : i32 to index
    %280 = memref.load %arg2[%279] : memref<64xi32, #tpu.memory_space<smem>>
    %281 = arith.index_cast %280 : i32 to index
    %c0_194 = arith.constant 0 : index
    %282 = vector.load %arg3[%281, %c0_194] : memref<128x128xf32, #tpu.memory_space<vmem>>, vector<1x128xf32>
    %c1_195 = arith.constant 1 : index
    %c0_196 = arith.constant 0 : index
    %283 = vector.load %arg4[%c1_195, %c0_196] : memref<8x128xf32, #tpu.memory_space<vmem>>, vector<1x128xf32>
    %284 = arith.addf %283, %282 : vector<1x128xf32>
    %c1_197 = arith.constant 1 : index
    %c0_198 = arith.constant 0 : index
    %285 = vector.load %arg4[%c1_197, %c0_198] : memref<8x128xf32, #tpu.memory_space<vmem>>, vector<1x128xf32>
    tpu.vector_store %arg4[%c1_197, %c0_198], %284 {strides = array<i32>} : memref<8x128xf32, #tpu.memory_space<vmem>>, vector<1x128xf32>,
    %c2_i32_199 = arith.constant 2 : i32
    %286 = arith.addi %269, %c2_i32_199 : i32
    %287 = arith.index_cast %286 : i32 to index
    %288 = memref.load %arg2[%287] : memref<64xi32, #tpu.memory_space<smem>>
    %289 = arith.index_cast %288 : i32 to index
    %c0_200 = arith.constant 0 : index
    %290 = vector.load %arg3[%289, %c0_200] : memref<128x128xf32, #tpu.memory_space<vmem>>, vector<1x128xf32>
    %c2_201 = arith.constant 2 : index
    %c0_202 = arith.constant 0 : index
    %291 = vector.load %arg4[%c2_201, %c0_202] : memref<8x128xf32, #tpu.memory_space<vmem>>, vector<1x128xf32>
    %292 = arith.addf %291, %290 : vector<1x128xf32>
    %c2_203 = arith.constant 2 : index
    %c0_204 = arith.constant 0 : index
    %293 = vector.load %arg4[%c2_203, %c0_204] : memref<8x128xf32, #tpu.memory_space<vmem>>, vector<1x128xf32>
    tpu.vector_store %arg4[%c2_203, %c0_204], %292 {strides = array<i32>} : memref<8x128xf32, #tpu.memory_space<vmem>>, vector<1x128xf32>,
    %c3_i32_205 = arith.constant 3 : i32
    %294 = arith.addi %269, %c3_i32_205 : i32
    %295 = arith.index_cast %294 : i32 to index
    %296 = memref.load %arg2[%295] : memref<64xi32, #tpu.memory_space<smem>>
    %297 = arith.index_cast %296 : i32 to index
    %c0_206 = arith.constant 0 : index
    %298 = vector.load %arg3[%297, %c0_206] : memref<128x128xf32, #tpu.memory_space<vmem>>, vector<1x128xf32>
    %c3_207 = arith.constant 3 : index
    %c0_208 = arith.constant 0 : index
    %299 = vector.load %arg4[%c3_207, %c0_208] : memref<8x128xf32, #tpu.memory_space<vmem>>, vector<1x128xf32>
    %300 = arith.addf %299, %298 : vector<1x128xf32>
    %c3_209 = arith.constant 3 : index
    %c0_210 = arith.constant 0 : index
    %301 = vector.load %arg4[%c3_209, %c0_210] : memref<8x128xf32, #tpu.memory_space<vmem>>, vector<1x128xf32>
    tpu.vector_store %arg4[%c3_209, %c0_210], %300 {strides = array<i32>} : memref<8x128xf32, #tpu.memory_space<vmem>>, vector<1x128xf32>,
    %c4_i32_211 = arith.constant 4 : i32
    %302 = arith.addi %269, %c4_i32_211 : i32
    %303 = arith.index_cast %302 : i32 to index
    %304 = memref.load %arg2[%303] : memref<64xi32, #tpu.memory_space<smem>>
    %305 = arith.index_cast %304 : i32 to index
    %c0_212 = arith.constant 0 : index
    %306 = vector.load %arg3[%305, %c0_212] : memref<128x128xf32, #tpu.memory_space<vmem>>, vector<1x128xf32>
    %c4_213 = arith.constant 4 : index
    %c0_214 = arith.constant 0 : index
    %307 = vector.load %arg4[%c4_213, %c0_214] : memref<8x128xf32, #tpu.memory_space<vmem>>, vector<1x128xf32>
    %308 = arith.addf %307, %306 : vector<1x128xf32>
    %c4_215 = arith.constant 4 : index
    %c0_216 = arith.constant 0 : index
    %309 = vector.load %arg4[%c4_215, %c0_216] : memref<8x128xf32, #tpu.memory_space<vmem>>, vector<1x128xf32>
    tpu.vector_store %arg4[%c4_215, %c0_216], %308 {strides = array<i32>} : memref<8x128xf32, #tpu.memory_space<vmem>>, vector<1x128xf32>,
    %c5_i32_217 = arith.constant 5 : i32
    %310 = arith.addi %269, %c5_i32_217 : i32
    %311 = arith.index_cast %310 : i32 to index
    %312 = memref.load %arg2[%311] : memref<64xi32, #tpu.memory_space<smem>>
    %313 = arith.index_cast %312 : i32 to index
    %c0_218 = arith.constant 0 : index
    %314 = vector.load %arg3[%313, %c0_218] : memref<128x128xf32, #tpu.memory_space<vmem>>, vector<1x128xf32>
    %c5_219 = arith.constant 5 : index
    %c0_220 = arith.constant 0 : index
    %315 = vector.load %arg4[%c5_219, %c0_220] : memref<8x128xf32, #tpu.memory_space<vmem>>, vector<1x128xf32>
    %316 = arith.addf %315, %314 : vector<1x128xf32>
    %c5_221 = arith.constant 5 : index
    %c0_222 = arith.constant 0 : index
    %317 = vector.load %arg4[%c5_221, %c0_222] : memref<8x128xf32, #tpu.memory_space<vmem>>, vector<1x128xf32>
    tpu.vector_store %arg4[%c5_221, %c0_222], %316 {strides = array<i32>} : memref<8x128xf32, #tpu.memory_space<vmem>>, vector<1x128xf32>,
    %c6_i32_223 = arith.constant 6 : i32
    %318 = arith.addi %269, %c6_i32_223 : i32
    %319 = arith.index_cast %318 : i32 to index
    %320 = memref.load %arg2[%319] : memref<64xi32, #tpu.memory_space<smem>>
    %321 = arith.index_cast %320 : i32 to index
    %c0_224 = arith.constant 0 : index
    %322 = vector.load %arg3[%321, %c0_224] : memref<128x128xf32, #tpu.memory_space<vmem>>, vector<1x128xf32>
    %c6_225 = arith.constant 6 : index
    %c0_226 = arith.constant 0 : index
    %323 = vector.load %arg4[%c6_225, %c0_226] : memref<8x128xf32, #tpu.memory_space<vmem>>, vector<1x128xf32>
    %324 = arith.addf %323, %322 : vector<1x128xf32>
    %c6_227 = arith.constant 6 : index
    %c0_228 = arith.constant 0 : index
    %325 = vector.load %arg4[%c6_227, %c0_228] : memref<8x128xf32, #tpu.memory_space<vmem>>, vector<1x128xf32>
    tpu.vector_store %arg4[%c6_227, %c0_228], %324 {strides = array<i32>} : memref<8x128xf32, #tpu.memory_space<vmem>>, vector<1x128xf32>,
    %c7_i32_229 = arith.constant 7 : i32
    %326 = arith.addi %269, %c7_i32_229 : i32
    %327 = arith.index_cast %326 : i32 to index
    %328 = memref.load %arg2[%327] : memref<64xi32, #tpu.memory_space<smem>>
    %329 = arith.index_cast %328 : i32 to index
    %c0_230 = arith.constant 0 : index
    %330 = vector.load %arg3[%329, %c0_230] : memref<128x128xf32, #tpu.memory_space<vmem>>, vector<1x128xf32>
    %c7_231 = arith.constant 7 : index
    %c0_232 = arith.constant 0 : index
    %331 = vector.load %arg4[%c7_231, %c0_232] : memref<8x128xf32, #tpu.memory_space<vmem>>, vector<1x128xf32>
    %332 = arith.addf %331, %330 : vector<1x128xf32>
    %c7_233 = arith.constant 7 : index
    %c0_234 = arith.constant 0 : index
    %333 = vector.load %arg4[%c7_233, %c0_234] : memref<8x128xf32, #tpu.memory_space<vmem>>, vector<1x128xf32>
    tpu.vector_store %arg4[%c7_233, %c0_234], %332 {strides = array<i32>} : memref<8x128xf32, #tpu.memory_space<vmem>>, vector<1x128xf32>,
    %c5_i32_235 = arith.constant 5 : i32
    %c8_i32_236 = arith.constant 8 : i32
    %334 = arith.muli %c5_i32_235, %c8_i32_236 : i32
    %335 = arith.addi %3, %334 : i32
    %c0_i32_237 = arith.constant 0 : i32
    %336 = arith.addi %335, %c0_i32_237 : i32
    %337 = arith.index_cast %336 : i32 to index
    %338 = memref.load %arg2[%337] : memref<64xi32, #tpu.memory_space<smem>>
    %339 = arith.index_cast %338 : i32 to index
    %c0_238 = arith.constant 0 : index
    %340 = vector.load %arg3[%339, %c0_238] : memref<128x128xf32, #tpu.memory_space<vmem>>, vector<1x128xf32>
    %c0_239 = arith.constant 0 : index
    %c0_240 = arith.constant 0 : index
    %341 = vector.load %arg4[%c0_239, %c0_240] : memref<8x128xf32, #tpu.memory_space<vmem>>, vector<1x128xf32>
    %342 = arith.addf %341, %340 : vector<1x128xf32>
    %c0_241 = arith.constant 0 : index
    %c0_242 = arith.constant 0 : index
    %343 = vector.load %arg4[%c0_241, %c0_242] : memref<8x128xf32, #tpu.memory_space<vmem>>, vector<1x128xf32>
    tpu.vector_store %arg4[%c0_241, %c0_242], %342 {strides = array<i32>} : memref<8x128xf32, #tpu.memory_space<vmem>>, vector<1x128xf32>,
    %c1_i32_243 = arith.constant 1 : i32
    %344 = arith.addi %335, %c1_i32_243 : i32
    %345 = arith.index_cast %344 : i32 to index
    %346 = memref.load %arg2[%345] : memref<64xi32, #tpu.memory_space<smem>>
    %347 = arith.index_cast %346 : i32 to index
    %c0_244 = arith.constant 0 : index
    %348 = vector.load %arg3[%347, %c0_244] : memref<128x128xf32, #tpu.memory_space<vmem>>, vector<1x128xf32>
    %c1_245 = arith.constant 1 : index
    %c0_246 = arith.constant 0 : index
    %349 = vector.load %arg4[%c1_245, %c0_246] : memref<8x128xf32, #tpu.memory_space<vmem>>, vector<1x128xf32>
    %350 = arith.addf %349, %348 : vector<1x128xf32>
    %c1_247 = arith.constant 1 : index
    %c0_248 = arith.constant 0 : index
    %351 = vector.load %arg4[%c1_247, %c0_248] : memref<8x128xf32, #tpu.memory_space<vmem>>, vector<1x128xf32>
    tpu.vector_store %arg4[%c1_247, %c0_248], %350 {strides = array<i32>} : memref<8x128xf32, #tpu.memory_space<vmem>>, vector<1x128xf32>,
    %c2_i32_249 = arith.constant 2 : i32
    %352 = arith.addi %335, %c2_i32_249 : i32
    %353 = arith.index_cast %352 : i32 to index
    %354 = memref.load %arg2[%353] : memref<64xi32, #tpu.memory_space<smem>>
    %355 = arith.index_cast %354 : i32 to index
    %c0_250 = arith.constant 0 : index
    %356 = vector.load %arg3[%355, %c0_250] : memref<128x128xf32, #tpu.memory_space<vmem>>, vector<1x128xf32>
    %c2_251 = arith.constant 2 : index
    %c0_252 = arith.constant 0 : index
    %357 = vector.load %arg4[%c2_251, %c0_252] : memref<8x128xf32, #tpu.memory_space<vmem>>, vector<1x128xf32>
    %358 = arith.addf %357, %356 : vector<1x128xf32>
    %c2_253 = arith.constant 2 : index
    %c0_254 = arith.constant 0 : index
    %359 = vector.load %arg4[%c2_253, %c0_254] : memref<8x128xf32, #tpu.memory_space<vmem>>, vector<1x128xf32>
    tpu.vector_store %arg4[%c2_253, %c0_254], %358 {strides = array<i32>} : memref<8x128xf32, #tpu.memory_space<vmem>>, vector<1x128xf32>,
    %c3_i32_255 = arith.constant 3 : i32
    %360 = arith.addi %335, %c3_i32_255 : i32
    %361 = arith.index_cast %360 : i32 to index
    %362 = memref.load %arg2[%361] : memref<64xi32, #tpu.memory_space<smem>>
    %363 = arith.index_cast %362 : i32 to index
    %c0_256 = arith.constant 0 : index
    %364 = vector.load %arg3[%363, %c0_256] : memref<128x128xf32, #tpu.memory_space<vmem>>, vector<1x128xf32>
    %c3_257 = arith.constant 3 : index
    %c0_258 = arith.constant 0 : index
    %365 = vector.load %arg4[%c3_257, %c0_258] : memref<8x128xf32, #tpu.memory_space<vmem>>, vector<1x128xf32>
    %366 = arith.addf %365, %364 : vector<1x128xf32>
    %c3_259 = arith.constant 3 : index
    %c0_260 = arith.constant 0 : index
    %367 = vector.load %arg4[%c3_259, %c0_260] : memref<8x128xf32, #tpu.memory_space<vmem>>, vector<1x128xf32>
    tpu.vector_store %arg4[%c3_259, %c0_260], %366 {strides = array<i32>} : memref<8x128xf32, #tpu.memory_space<vmem>>, vector<1x128xf32>,
    %c4_i32_261 = arith.constant 4 : i32
    %368 = arith.addi %335, %c4_i32_261 : i32
    %369 = arith.index_cast %368 : i32 to index
    %370 = memref.load %arg2[%369] : memref<64xi32, #tpu.memory_space<smem>>
    %371 = arith.index_cast %370 : i32 to index
    %c0_262 = arith.constant 0 : index
    %372 = vector.load %arg3[%371, %c0_262] : memref<128x128xf32, #tpu.memory_space<vmem>>, vector<1x128xf32>
    %c4_263 = arith.constant 4 : index
    %c0_264 = arith.constant 0 : index
    %373 = vector.load %arg4[%c4_263, %c0_264] : memref<8x128xf32, #tpu.memory_space<vmem>>, vector<1x128xf32>
    %374 = arith.addf %373, %372 : vector<1x128xf32>
    %c4_265 = arith.constant 4 : index
    %c0_266 = arith.constant 0 : index
    %375 = vector.load %arg4[%c4_265, %c0_266] : memref<8x128xf32, #tpu.memory_space<vmem>>, vector<1x128xf32>
    tpu.vector_store %arg4[%c4_265, %c0_266], %374 {strides = array<i32>} : memref<8x128xf32, #tpu.memory_space<vmem>>, vector<1x128xf32>,
    %c5_i32_267 = arith.constant 5 : i32
    %376 = arith.addi %335, %c5_i32_267 : i32
    %377 = arith.index_cast %376 : i32 to index
    %378 = memref.load %arg2[%377] : memref<64xi32, #tpu.memory_space<smem>>
    %379 = arith.index_cast %378 : i32 to index
    %c0_268 = arith.constant 0 : index
    %380 = vector.load %arg3[%379, %c0_268] : memref<128x128xf32, #tpu.memory_space<vmem>>, vector<1x128xf32>
    %c5_269 = arith.constant 5 : index
    %c0_270 = arith.constant 0 : index
    %381 = vector.load %arg4[%c5_269, %c0_270] : memref<8x128xf32, #tpu.memory_space<vmem>>, vector<1x128xf32>
    %382 = arith.addf %381, %380 : vector<1x128xf32>
    %c5_271 = arith.constant 5 : index
    %c0_272 = arith.constant 0 : index
    %383 = vector.load %arg4[%c5_271, %c0_272] : memref<8x128xf32, #tpu.memory_space<vmem>>, vector<1x128xf32>
    tpu.vector_store %arg4[%c5_271, %c0_272], %382 {strides = array<i32>} : memref<8x128xf32, #tpu.memory_space<vmem>>, vector<1x128xf32>,
    %c6_i32_273 = arith.constant 6 : i32
    %384 = arith.addi %335, %c6_i32_273 : i32
    %385 = arith.index_cast %384 : i32 to index
    %386 = memref.load %arg2[%385] : memref<64xi32, #tpu.memory_space<smem>>
    %387 = arith.index_cast %386 : i32 to index
    %c0_274 = arith.constant 0 : index
    %388 = vector.load %arg3[%387, %c0_274] : memref<128x128xf32, #tpu.memory_space<vmem>>, vector<1x128xf32>
    %c6_275 = arith.constant 6 : index
    %c0_276 = arith.constant 0 : index
    %389 = vector.load %arg4[%c6_275, %c0_276] : memref<8x128xf32, #tpu.memory_space<vmem>>, vector<1x128xf32>
    %390 = arith.addf %389, %388 : vector<1x128xf32>
    %c6_277 = arith.constant 6 : index
    %c0_278 = arith.constant 0 : index
    %391 = vector.load %arg4[%c6_277, %c0_278] : memref<8x128xf32, #tpu.memory_space<vmem>>, vector<1x128xf32>
    tpu.vector_store %arg4[%c6_277, %c0_278], %390 {strides = array<i32>} : memref<8x128xf32, #tpu.memory_space<vmem>>, vector<1x128xf32>,
    %c7_i32_279 = arith.constant 7 : i32
    %392 = arith.addi %335, %c7_i32_279 : i32
    %393 = arith.index_cast %392 : i32 to index
    %394 = memref.load %arg2[%393] : memref<64xi32, #tpu.memory_space<smem>>
    %395 = arith.index_cast %394 : i32 to index
    %c0_280 = arith.constant 0 : index
    %396 = vector.load %arg3[%395, %c0_280] : memref<128x128xf32, #tpu.memory_space<vmem>>, vector<1x128xf32>
    %c7_281 = arith.constant 7 : index
    %c0_282 = arith.constant 0 : index
    %397 = vector.load %arg4[%c7_281, %c0_282] : memref<8x128xf32, #tpu.memory_space<vmem>>, vector<1x128xf32>
    %398 = arith.addf %397, %396 : vector<1x128xf32>
    %c7_283 = arith.constant 7 : index
    %c0_284 = arith.constant 0 : index
    %399 = vector.load %arg4[%c7_283, %c0_284] : memref<8x128xf32, #tpu.memory_space<vmem>>, vector<1x128xf32>
    tpu.vector_store %arg4[%c7_283, %c0_284], %398 {strides = array<i32>} : memref<8x128xf32, #tpu.memory_space<vmem>>, vector<1x128xf32>,
    %c6_i32_285 = arith.constant 6 : i32
    %c8_i32_286 = arith.constant 8 : i32
    %400 = arith.muli %c6_i32_285, %c8_i32_286 : i32
    %401 = arith.addi %3, %400 : i32
    %c0_i32_287 = arith.constant 0 : i32
    %402 = arith.addi %401, %c0_i32_287 : i32
    %403 = arith.index_cast %402 : i32 to index
    %404 = memref.load %arg2[%403] : memref<64xi32, #tpu.memory_space<smem>>
    %405 = arith.index_cast %404 : i32 to index
    %c0_288 = arith.constant 0 : index
    %406 = vector.load %arg3[%405, %c0_288] : memref<128x128xf32, #tpu.memory_space<vmem>>, vector<1x128xf32>
    %c0_289 = arith.constant 0 : index
    %c0_290 = arith.constant 0 : index
    %407 = vector.load %arg4[%c0_289, %c0_290] : memref<8x128xf32, #tpu.memory_space<vmem>>, vector<1x128xf32>
    %408 = arith.addf %407, %406 : vector<1x128xf32>
    %c0_291 = arith.constant 0 : index
    %c0_292 = arith.constant 0 : index
    %409 = vector.load %arg4[%c0_291, %c0_292] : memref<8x128xf32, #tpu.memory_space<vmem>>, vector<1x128xf32>
    tpu.vector_store %arg4[%c0_291, %c0_292], %408 {strides = array<i32>} : memref<8x128xf32, #tpu.memory_space<vmem>>, vector<1x128xf32>,
    %c1_i32_293 = arith.constant 1 : i32
    %410 = arith.addi %401, %c1_i32_293 : i32
    %411 = arith.index_cast %410 : i32 to index
    %412 = memref.load %arg2[%411] : memref<64xi32, #tpu.memory_space<smem>>
    %413 = arith.index_cast %412 : i32 to index
    %c0_294 = arith.constant 0 : index
    %414 = vector.load %arg3[%413, %c0_294] : memref<128x128xf32, #tpu.memory_space<vmem>>, vector<1x128xf32>
    %c1_295 = arith.constant 1 : index
    %c0_296 = arith.constant 0 : index
    %415 = vector.load %arg4[%c1_295, %c0_296] : memref<8x128xf32, #tpu.memory_space<vmem>>, vector<1x128xf32>
    %416 = arith.addf %415, %414 : vector<1x128xf32>
    %c1_297 = arith.constant 1 : index
    %c0_298 = arith.constant 0 : index
    %417 = vector.load %arg4[%c1_297, %c0_298] : memref<8x128xf32, #tpu.memory_space<vmem>>, vector<1x128xf32>
    tpu.vector_store %arg4[%c1_297, %c0_298], %416 {strides = array<i32>} : memref<8x128xf32, #tpu.memory_space<vmem>>, vector<1x128xf32>,
    %c2_i32_299 = arith.constant 2 : i32
    %418 = arith.addi %401, %c2_i32_299 : i32
    %419 = arith.index_cast %418 : i32 to index
    %420 = memref.load %arg2[%419] : memref<64xi32, #tpu.memory_space<smem>>
    %421 = arith.index_cast %420 : i32 to index
    %c0_300 = arith.constant 0 : index
    %422 = vector.load %arg3[%421, %c0_300] : memref<128x128xf32, #tpu.memory_space<vmem>>, vector<1x128xf32>
    %c2_301 = arith.constant 2 : index
    %c0_302 = arith.constant 0 : index
    %423 = vector.load %arg4[%c2_301, %c0_302] : memref<8x128xf32, #tpu.memory_space<vmem>>, vector<1x128xf32>
    %424 = arith.addf %423, %422 : vector<1x128xf32>
    %c2_303 = arith.constant 2 : index
    %c0_304 = arith.constant 0 : index
    %425 = vector.load %arg4[%c2_303, %c0_304] : memref<8x128xf32, #tpu.memory_space<vmem>>, vector<1x128xf32>
    tpu.vector_store %arg4[%c2_303, %c0_304], %424 {strides = array<i32>} : memref<8x128xf32, #tpu.memory_space<vmem>>, vector<1x128xf32>,
    %c3_i32_305 = arith.constant 3 : i32
    %426 = arith.addi %401, %c3_i32_305 : i32
    %427 = arith.index_cast %426 : i32 to index
    %428 = memref.load %arg2[%427] : memref<64xi32, #tpu.memory_space<smem>>
    %429 = arith.index_cast %428 : i32 to index
    %c0_306 = arith.constant 0 : index
    %430 = vector.load %arg3[%429, %c0_306] : memref<128x128xf32, #tpu.memory_space<vmem>>, vector<1x128xf32>
    %c3_307 = arith.constant 3 : index
    %c0_308 = arith.constant 0 : index
    %431 = vector.load %arg4[%c3_307, %c0_308] : memref<8x128xf32, #tpu.memory_space<vmem>>, vector<1x128xf32>
    %432 = arith.addf %431, %430 : vector<1x128xf32>
    %c3_309 = arith.constant 3 : index
    %c0_310 = arith.constant 0 : index
    %433 = vector.load %arg4[%c3_309, %c0_310] : memref<8x128xf32, #tpu.memory_space<vmem>>, vector<1x128xf32>
    tpu.vector_store %arg4[%c3_309, %c0_310], %432 {strides = array<i32>} : memref<8x128xf32, #tpu.memory_space<vmem>>, vector<1x128xf32>,
    %c4_i32_311 = arith.constant 4 : i32
    %434 = arith.addi %401, %c4_i32_311 : i32
    %435 = arith.index_cast %434 : i32 to index
    %436 = memref.load %arg2[%435] : memref<64xi32, #tpu.memory_space<smem>>
    %437 = arith.index_cast %436 : i32 to index
    %c0_312 = arith.constant 0 : index
    %438 = vector.load %arg3[%437, %c0_312] : memref<128x128xf32, #tpu.memory_space<vmem>>, vector<1x128xf32>
    %c4_313 = arith.constant 4 : index
    %c0_314 = arith.constant 0 : index
    %439 = vector.load %arg4[%c4_313, %c0_314] : memref<8x128xf32, #tpu.memory_space<vmem>>, vector<1x128xf32>
    %440 = arith.addf %439, %438 : vector<1x128xf32>
    %c4_315 = arith.constant 4 : index
    %c0_316 = arith.constant 0 : index
    %441 = vector.load %arg4[%c4_315, %c0_316] : memref<8x128xf32, #tpu.memory_space<vmem>>, vector<1x128xf32>
    tpu.vector_store %arg4[%c4_315, %c0_316], %440 {strides = array<i32>} : memref<8x128xf32, #tpu.memory_space<vmem>>, vector<1x128xf32>,
    %c5_i32_317 = arith.constant 5 : i32
    %442 = arith.addi %401, %c5_i32_317 : i32
    %443 = arith.index_cast %442 : i32 to index
    %444 = memref.load %arg2[%443] : memref<64xi32, #tpu.memory_space<smem>>
    %445 = arith.index_cast %444 : i32 to index
    %c0_318 = arith.constant 0 : index
    %446 = vector.load %arg3[%445, %c0_318] : memref<128x128xf32, #tpu.memory_space<vmem>>, vector<1x128xf32>
    %c5_319 = arith.constant 5 : index
    %c0_320 = arith.constant 0 : index
    %447 = vector.load %arg4[%c5_319, %c0_320] : memref<8x128xf32, #tpu.memory_space<vmem>>, vector<1x128xf32>
    %448 = arith.addf %447, %446 : vector<1x128xf32>
    %c5_321 = arith.constant 5 : index
    %c0_322 = arith.constant 0 : index
    %449 = vector.load %arg4[%c5_321, %c0_322] : memref<8x128xf32, #tpu.memory_space<vmem>>, vector<1x128xf32>
    tpu.vector_store %arg4[%c5_321, %c0_322], %448 {strides = array<i32>} : memref<8x128xf32, #tpu.memory_space<vmem>>, vector<1x128xf32>,
    %c6_i32_323 = arith.constant 6 : i32
    %450 = arith.addi %401, %c6_i32_323 : i32
    %451 = arith.index_cast %450 : i32 to index
    %452 = memref.load %arg2[%451] : memref<64xi32, #tpu.memory_space<smem>>
    %453 = arith.index_cast %452 : i32 to index
    %c0_324 = arith.constant 0 : index
    %454 = vector.load %arg3[%453, %c0_324] : memref<128x128xf32, #tpu.memory_space<vmem>>, vector<1x128xf32>
    %c6_325 = arith.constant 6 : index
    %c0_326 = arith.constant 0 : index
    %455 = vector.load %arg4[%c6_325, %c0_326] : memref<8x128xf32, #tpu.memory_space<vmem>>, vector<1x128xf32>
    %456 = arith.addf %455, %454 : vector<1x128xf32>
    %c6_327 = arith.constant 6 : index
    %c0_328 = arith.constant 0 : index
    %457 = vector.load %arg4[%c6_327, %c0_328] : memref<8x128xf32, #tpu.memory_space<vmem>>, vector<1x128xf32>
    tpu.vector_store %arg4[%c6_327, %c0_328], %456 {strides = array<i32>} : memref<8x128xf32, #tpu.memory_space<vmem>>, vector<1x128xf32>,
    %c7_i32_329 = arith.constant 7 : i32
    %458 = arith.addi %401, %c7_i32_329 : i32
    %459 = arith.index_cast %458 : i32 to index
    %460 = memref.load %arg2[%459] : memref<64xi32, #tpu.memory_space<smem>>
    %461 = arith.index_cast %460 : i32 to index
    %c0_330 = arith.constant 0 : index
    %462 = vector.load %arg3[%461, %c0_330] : memref<128x128xf32, #tpu.memory_space<vmem>>, vector<1x128xf32>
    %c7_331 = arith.constant 7 : index
    %c0_332 = arith.constant 0 : index
    %463 = vector.load %arg4[%c7_331, %c0_332] : memref<8x128xf32, #tpu.memory_space<vmem>>, vector<1x128xf32>
    %464 = arith.addf %463, %462 : vector<1x128xf32>
    %c7_333 = arith.constant 7 : index
    %c0_334 = arith.constant 0 : index
    %465 = vector.load %arg4[%c7_333, %c0_334] : memref<8x128xf32, #tpu.memory_space<vmem>>, vector<1x128xf32>
    tpu.vector_store %arg4[%c7_333, %c0_334], %464 {strides = array<i32>} : memref<8x128xf32, #tpu.memory_space<vmem>>, vector<1x128xf32>,
    %c7_i32_335 = arith.constant 7 : i32
    %c8_i32_336 = arith.constant 8 : i32
    %466 = arith.muli %c7_i32_335, %c8_i32_336 : i32
    %467 = arith.addi %3, %466 : i32
    %c0_i32_337 = arith.constant 0 : i32
    %468 = arith.addi %467, %c0_i32_337 : i32
    %469 = arith.index_cast %468 : i32 to index
    %470 = memref.load %arg2[%469] : memref<64xi32, #tpu.memory_space<smem>>
    %471 = arith.index_cast %470 : i32 to index
    %c0_338 = arith.constant 0 : index
    %472 = vector.load %arg3[%471, %c0_338] : memref<128x128xf32, #tpu.memory_space<vmem>>, vector<1x128xf32>
    %c0_339 = arith.constant 0 : index
    %c0_340 = arith.constant 0 : index
    %473 = vector.load %arg4[%c0_339, %c0_340] : memref<8x128xf32, #tpu.memory_space<vmem>>, vector<1x128xf32>
    %474 = arith.addf %473, %472 : vector<1x128xf32>
    %c0_341 = arith.constant 0 : index
    %c0_342 = arith.constant 0 : index
    %475 = vector.load %arg4[%c0_341, %c0_342] : memref<8x128xf32, #tpu.memory_space<vmem>>, vector<1x128xf32>
    tpu.vector_store %arg4[%c0_341, %c0_342], %474 {strides = array<i32>} : memref<8x128xf32, #tpu.memory_space<vmem>>, vector<1x128xf32>,
    %c1_i32_343 = arith.constant 1 : i32
    %476 = arith.addi %467, %c1_i32_343 : i32
    %477 = arith.index_cast %476 : i32 to index
    %478 = memref.load %arg2[%477] : memref<64xi32, #tpu.memory_space<smem>>
    %479 = arith.index_cast %478 : i32 to index
    %c0_344 = arith.constant 0 : index
    %480 = vector.load %arg3[%479, %c0_344] : memref<128x128xf32, #tpu.memory_space<vmem>>, vector<1x128xf32>
    %c1_345 = arith.constant 1 : index
    %c0_346 = arith.constant 0 : index
    %481 = vector.load %arg4[%c1_345, %c0_346] : memref<8x128xf32, #tpu.memory_space<vmem>>, vector<1x128xf32>
    %482 = arith.addf %481, %480 : vector<1x128xf32>
    %c1_347 = arith.constant 1 : index
    %c0_348 = arith.constant 0 : index
    %483 = vector.load %arg4[%c1_347, %c0_348] : memref<8x128xf32, #tpu.memory_space<vmem>>, vector<1x128xf32>
    tpu.vector_store %arg4[%c1_347, %c0_348], %482 {strides = array<i32>} : memref<8x128xf32, #tpu.memory_space<vmem>>, vector<1x128xf32>,
    %c2_i32_349 = arith.constant 2 : i32
    %484 = arith.addi %467, %c2_i32_349 : i32
    %485 = arith.index_cast %484 : i32 to index
    %486 = memref.load %arg2[%485] : memref<64xi32, #tpu.memory_space<smem>>
    %487 = arith.index_cast %486 : i32 to index
    %c0_350 = arith.constant 0 : index
    %488 = vector.load %arg3[%487, %c0_350] : memref<128x128xf32, #tpu.memory_space<vmem>>, vector<1x128xf32>
    %c2_351 = arith.constant 2 : index
    %c0_352 = arith.constant 0 : index
    %489 = vector.load %arg4[%c2_351, %c0_352] : memref<8x128xf32, #tpu.memory_space<vmem>>, vector<1x128xf32>
    %490 = arith.addf %489, %488 : vector<1x128xf32>
    %c2_353 = arith.constant 2 : index
    %c0_354 = arith.constant 0 : index
    %491 = vector.load %arg4[%c2_353, %c0_354] : memref<8x128xf32, #tpu.memory_space<vmem>>, vector<1x128xf32>
    tpu.vector_store %arg4[%c2_353, %c0_354], %490 {strides = array<i32>} : memref<8x128xf32, #tpu.memory_space<vmem>>, vector<1x128xf32>,
    %c3_i32_355 = arith.constant 3 : i32
    %492 = arith.addi %467, %c3_i32_355 : i32
    %493 = arith.index_cast %492 : i32 to index
    %494 = memref.load %arg2[%493] : memref<64xi32, #tpu.memory_space<smem>>
    %495 = arith.index_cast %494 : i32 to index
    %c0_356 = arith.constant 0 : index
    %496 = vector.load %arg3[%495, %c0_356] : memref<128x128xf32, #tpu.memory_space<vmem>>, vector<1x128xf32>
    %c3_357 = arith.constant 3 : index
    %c0_358 = arith.constant 0 : index
    %497 = vector.load %arg4[%c3_357, %c0_358] : memref<8x128xf32, #tpu.memory_space<vmem>>, vector<1x128xf32>
    %498 = arith.addf %497, %496 : vector<1x128xf32>
    %c3_359 = arith.constant 3 : index
    %c0_360 = arith.constant 0 : index
    %499 = vector.load %arg4[%c3_359, %c0_360] : memref<8x128xf32, #tpu.memory_space<vmem>>, vector<1x128xf32>
    tpu.vector_store %arg4[%c3_359, %c0_360], %498 {strides = array<i32>} : memref<8x128xf32, #tpu.memory_space<vmem>>, vector<1x128xf32>,
    %c4_i32_361 = arith.constant 4 : i32
    %500 = arith.addi %467, %c4_i32_361 : i32
    %501 = arith.index_cast %500 : i32 to index
    %502 = memref.load %arg2[%501] : memref<64xi32, #tpu.memory_space<smem>>
    %503 = arith.index_cast %502 : i32 to index
    %c0_362 = arith.constant 0 : index
    %504 = vector.load %arg3[%503, %c0_362] : memref<128x128xf32, #tpu.memory_space<vmem>>, vector<1x128xf32>
    %c4_363 = arith.constant 4 : index
    %c0_364 = arith.constant 0 : index
    %505 = vector.load %arg4[%c4_363, %c0_364] : memref<8x128xf32, #tpu.memory_space<vmem>>, vector<1x128xf32>
    %506 = arith.addf %505, %504 : vector<1x128xf32>
    %c4_365 = arith.constant 4 : index
    %c0_366 = arith.constant 0 : index
    %507 = vector.load %arg4[%c4_365, %c0_366] : memref<8x128xf32, #tpu.memory_space<vmem>>, vector<1x128xf32>
    tpu.vector_store %arg4[%c4_365, %c0_366], %506 {strides = array<i32>} : memref<8x128xf32, #tpu.memory_space<vmem>>, vector<1x128xf32>,
    %c5_i32_367 = arith.constant 5 : i32
    %508 = arith.addi %467, %c5_i32_367 : i32
    %509 = arith.index_cast %508 : i32 to index
    %510 = memref.load %arg2[%509] : memref<64xi32, #tpu.memory_space<smem>>
    %511 = arith.index_cast %510 : i32 to index
    %c0_368 = arith.constant 0 : index
    %512 = vector.load %arg3[%511, %c0_368] : memref<128x128xf32, #tpu.memory_space<vmem>>, vector<1x128xf32>
    %c5_369 = arith.constant 5 : index
    %c0_370 = arith.constant 0 : index
    %513 = vector.load %arg4[%c5_369, %c0_370] : memref<8x128xf32, #tpu.memory_space<vmem>>, vector<1x128xf32>
    %514 = arith.addf %513, %512 : vector<1x128xf32>
    %c5_371 = arith.constant 5 : index
    %c0_372 = arith.constant 0 : index
    %515 = vector.load %arg4[%c5_371, %c0_372] : memref<8x128xf32, #tpu.memory_space<vmem>>, vector<1x128xf32>
    tpu.vector_store %arg4[%c5_371, %c0_372], %514 {strides = array<i32>} : memref<8x128xf32, #tpu.memory_space<vmem>>, vector<1x128xf32>,
    %c6_i32_373 = arith.constant 6 : i32
    %516 = arith.addi %467, %c6_i32_373 : i32
    %517 = arith.index_cast %516 : i32 to index
    %518 = memref.load %arg2[%517] : memref<64xi32, #tpu.memory_space<smem>>
    %519 = arith.index_cast %518 : i32 to index
    %c0_374 = arith.constant 0 : index
    %520 = vector.load %arg3[%519, %c0_374] : memref<128x128xf32, #tpu.memory_space<vmem>>, vector<1x128xf32>
    %c6_375 = arith.constant 6 : index
    %c0_376 = arith.constant 0 : index
    %521 = vector.load %arg4[%c6_375, %c0_376] : memref<8x128xf32, #tpu.memory_space<vmem>>, vector<1x128xf32>
    %522 = arith.addf %521, %520 : vector<1x128xf32>
    %c6_377 = arith.constant 6 : index
    %c0_378 = arith.constant 0 : index
    %523 = vector.load %arg4[%c6_377, %c0_378] : memref<8x128xf32, #tpu.memory_space<vmem>>, vector<1x128xf32>
    tpu.vector_store %arg4[%c6_377, %c0_378], %522 {strides = array<i32>} : memref<8x128xf32, #tpu.memory_space<vmem>>, vector<1x128xf32>,
    %c7_i32_379 = arith.constant 7 : i32
    %524 = arith.addi %467, %c7_i32_379 : i32
    %525 = arith.index_cast %524 : i32 to index
    %526 = memref.load %arg2[%525] : memref<64xi32, #tpu.memory_space<smem>>
    %527 = arith.index_cast %526 : i32 to index
    %c0_380 = arith.constant 0 : index
    %528 = vector.load %arg3[%527, %c0_380] : memref<128x128xf32, #tpu.memory_space<vmem>>, vector<1x128xf32>
    %c7_381 = arith.constant 7 : index
    %c0_382 = arith.constant 0 : index
    %529 = vector.load %arg4[%c7_381, %c0_382] : memref<8x128xf32, #tpu.memory_space<vmem>>, vector<1x128xf32>
    %530 = arith.addf %529, %528 : vector<1x128xf32>
    %c7_383 = arith.constant 7 : index
    %c0_384 = arith.constant 0 : index
    %531 = vector.load %arg4[%c7_383, %c0_384] : memref<8x128xf32, #tpu.memory_space<vmem>>, vector<1x128xf32>
    tpu.vector_store %arg4[%c7_383, %c0_384], %530 {strides = array<i32>} : memref<8x128xf32, #tpu.memory_space<vmem>>, vector<1x128xf32>,
    %c8_i32_385 = arith.constant 8 : i32
    return
  }
  func.func @transform_0(%arg0: i32, %arg1: i32, %arg2: memref<64xi32, #tpu.memory_space<smem>>) -> (i32, i32) {
    %c0_i32 = arith.constant 0 : i32
    %c0_i32_0 = arith.constant 0 : i32
    return %c0_i32, %arg0 : i32, i32
  }
  func.func @transform_1(%arg0: i32, %arg1: i32, %arg2: memref<64xi32, #tpu.memory_space<smem>>) -> (i32, i32) {
    %c0_i32 = arith.constant 0 : i32
    %c0_i32_0 = arith.constant 0 : i32
    return %c0_i32, %arg0 : i32, i32
  }
}

</mosaic_0001>

<llo_original>
// kernel: tpu_custom_call.1
$region0: #{tpu_custom_call.1}
  #allocation0 [shape = 'u32[]', space=smem, size = 0x4, offset = 0x4, fixed_abs, tag = 'smem constant byte address 0x4 - core index']
  #allocation1 [shape = 'u32[144,128]{1,0:T(1,128)}', space=vmem, size = 0x12000, scoped, tag = 'internal scratch']
  #allocation2 [shape = 's32[1]{0}', space=sflag, size = 0x4, scoped, tag = 'scoped memory for tpu_custom_call.1']
  #allocation3 [shape = 'u8[512]{0}', space=smem, size = 0x200, scoped, tag = 'prefetched SMEM operand 0']
  %s0 = inlined_call_operand.hbm [shape: s32[64], index: 0, kind: input, shape index: {}]
  %s1 = inlined_call_operand.hbm [shape: f32[128,128], index: 1, kind: input, shape index: {}]
  %s2 = inlined_call_operand.hbm [shape: f32[8,128], index: 2, kind: output, shape index: {}]
  %s3 = sld [smem:[#allocation0]]
  $region22: #{tpu_custom_call.1} parent=0
    _
  %s5 = ssub.s32 1, %s3
  %s6 = scalar_select 0, %s5, %s3
  %8 = dma.hbm_to_smem %s0, 16, [#allocation3], [#allocation2]
  %9 = dma.done [#allocation2], 16
  %10 = sfence
  $region1: #{tpu_custom_call.1} parent=0
    #allocation4 [shape = 'u8[65536]{0}', space=vmem, size = 0x10000, scoped, tag = 'input window, operand 1, single buffered']
    #allocation5 [shape = 's32[1]{0}', space=sflag, size = 0x4, scoped, tag = 'scoped memory for tpu_custom_call.1']
    #allocation6 [shape = 's32[1]{0}', space=sflag, size = 0x4, scoped, tag = 'scoped memory for tpu_custom_call.1']
    #allocation7 [shape = 'u8[4096]{0}', space=vmem, size = 0x1000, scoped, tag = 'output window, operand 0, single buffered']
    %11 = vsyncpa [#allocation5], 0
    %12 = vsyncpa [#allocation6], 0
    // Predicated region
    $region2: #{tpu_custom_call.1} parent=1 // pred_check
      _
    $region3: #{tpu_custom_call.1} parent=1 // pred_check_branch
      %14 = sbr.rel (0) target = $region5
    $region4: #{tpu_custom_call.1} parent=1 // pred_region
      %s16 = ssub.s32 2048, 2048
      %17 = vsyncadd [#allocation5], %s16
      %s18 = sshll.u32 [#allocation4], 4
      %s19 = int_to_ptr.vmem [resolvable:$true] %s18
      %24 = dma.hbm_to_vmem [thread:$0]  %s1, 2048, %s19, [#allocation5], 128, 128, 8
    $region5: #{tpu_custom_call.1} parent=1 // pred_fallthru
      _
    // Predicated region
    $region6: #{tpu_custom_call.1} parent=1 // pred_check
      _
    $region7: #{tpu_custom_call.1} parent=1 // pred_check_branch
      %26 = sbr.rel (0) target = $region9
    $region8: #{tpu_custom_call.1} parent=1 // pred_region
      %27 = dma.done [#allocation5], 2048
    $region9: #{tpu_custom_call.1} parent=1 // pred_fallthru
      _
    %p28 = scmp.eq.s32.totalorder 0, 0
    // Predicated region
    $region10: #{tpu_custom_call.1} parent=1 // pred_check
      %p29 = pneg %p28
    $region11: #{tpu_custom_call.1} parent=1 // pred_check_branch
      %31 = sbr.rel (%p29) target = $region13
    $region12: #{tpu_custom_call.1} parent=1 // pred_region
      %32 = vst [vmem:[#allocation7] sm:$0xff] 0.0
    $region13: #{tpu_custom_call.1} parent=1 // pred_fallthru
      _
    %s33 = smul.u32 0, 64
    %s34 = sld [smem:[#allocation3 + %s33]]
    %s35 = scalar_lea.vmem [#allocation4], %s34
    %v36 = vld [vmem:[%s35] sm:$0x1]
    %v37 = vld [vmem:[#allocation7] sm:$0x1]
    %v38 = vadd.f32 %v37, %v36
    %39 = vst [vmem:[#allocation7] sm:$0x1] %v38
    %s40 = sadd.s32 %s33, 1
    %s41 = sld [smem:[#allocation3 + %s40]]
    %s42 = scalar_lea.vmem [#allocation4], %s41
    %v43 = vld [vmem:[%s42] sm:$0x1]
    %v44 = vld [vmem:[#allocation7 + $0x1] sm:$0x1]
    %v45 = vadd.f32 %v44, %v43
    %46 = vst [vmem:[#allocation7 + $0x1] sm:$0x1] %v45
    %s47 = sadd.s32 %s33, 2
    %s48 = sld [smem:[#allocation3 + %s47]]
    %s49 = scalar_lea.vmem [#allocation4], %s48
    %v50 = vld [vmem:[%s49] sm:$0x1]
    %v51 = vld [vmem:[#allocation7 + $0x2] sm:$0x1]
    %v52 = vadd.f32 %v51, %v50
    %53 = vst [vmem:[#allocation7 + $0x2] sm:$0x1] %v52
    %s54 = sadd.s32 %s33, 3
    %s55 = sld [smem:[#allocation3 + %s54]]
    %s56 = scalar_lea.vmem [#allocation4], %s55
    %v57 = vld [vmem:[%s56] sm:$0x1]
    %v58 = vld [vmem:[#allocation7 + $0x3] sm:$0x1]
    %v59 = vadd.f32 %v58, %v57
    %60 = vst [vmem:[#allocation7 + $0x3] sm:$0x1] %v59
    %s61 = sadd.s32 %s33, 4
    %s62 = sld [smem:[#allocation3 + %s61]]
    %s63 = scalar_lea.vmem [#allocation4], %s62
    %v64 = vld [vmem:[%s63] sm:$0x1]
    %v65 = vld [vmem:[#allocation7 + $0x4] sm:$0x1]
    %v66 = vadd.f32 %v65, %v64
    %67 = vst [vmem:[#allocation7 + $0x4] sm:$0x1] %v66
    %s68 = sadd.s32 %s33, 5
    %s69 = sld [smem:[#allocation3 + %s68]]
    %s70 = scalar_lea.vmem [#allocation4], %s69
    %v71 = vld [vmem:[%s70] sm:$0x1]
    %v72 = vld [vmem:[#allocation7 + $0x5] sm:$0x1]
    %v73 = vadd.f32 %v72, %v71
    %74 = vst [vmem:[#allocation7 + $0x5] sm:$0x1] %v73
    %s75 = sadd.s32 %s33, 6
    %s76 = sld [smem:[#allocation3 + %s75]]
    %s77 = scalar_lea.vmem [#allocation4], %s76
    %v78 = vld [vmem:[%s77] sm:$0x1]
    %v79 = vld [vmem:[#allocation7 + $0x6] sm:$0x1]
    %v80 = vadd.f32 %v79, %v78
    %81 = vst [vmem:[#allocation7 + $0x6] sm:$0x1] %v80
    %s82 = sadd.s32 %s33, 7
    %s83 = sld [smem:[#allocation3 + %s82]]
    %s84 = scalar_lea.vmem [#allocation4], %s83
    %v85 = vld [vmem:[%s84] sm:$0x1]
    %v86 = vld [vmem:[#allocation7 + $0x7] sm:$0x1]
    %v87 = vadd.f32 %v86, %v85
    %88 = vst [vmem:[#allocation7 + $0x7] sm:$0x1] %v87
    %s89 = sadd.s32 %s33, 8
    %s90 = sld [smem:[#allocation3 + %s89]]
    %s91 = scalar_lea.vmem [#allocation4], %s90
    %v92 = vld [vmem:[%s91] sm:$0x1]
    %v93 = vld [vmem:[#allocation7] sm:$0x1]
    %v94 = vadd.f32 %v93, %v92
    %95 = vst [vmem:[#allocation7] sm:$0x1] %v94
    %s96 = sadd.s32 %s33, 9
    %s97 = sld [smem:[#allocation3 + %s96]]
    %s98 = scalar_lea.vmem [#allocation4], %s97
    %v99 = vld [vmem:[%s98] sm:$0x1]
    %v100 = vld [vmem:[#allocation7 + $0x1] sm:$0x1]
    %v101 = vadd.f32 %v100, %v99
    %102 = vst [vmem:[#allocation7 + $0x1] sm:$0x1] %v101
    %s103 = sadd.s32 %s33, 10
    %s104 = sld [smem:[#allocation3 + %s103]]
    %s105 = scalar_lea.vmem [#allocation4], %s104
    %v106 = vld [vmem:[%s105] sm:$0x1]
    %v107 = vld [vmem:[#allocation7 + $0x2] sm:$0x1]
    %v108 = vadd.f32 %v107, %v106
    %109 = vst [vmem:[#allocation7 + $0x2] sm:$0x1] %v108
    %s110 = sadd.s32 %s33, 11
    %s111 = sld [smem:[#allocation3 + %s110]]
    %s112 = scalar_lea.vmem [#allocation4], %s111
    %v113 = vld [vmem:[%s112] sm:$0x1]
    %v114 = vld [vmem:[#allocation7 + $0x3] sm:$0x1]
    %v115 = vadd.f32 %v114, %v113
    %116 = vst [vmem:[#allocation7 + $0x3] sm:$0x1] %v115
    %s117 = sadd.s32 %s33, 12
    %s118 = sld [smem:[#allocation3 + %s117]]
    %s119 = scalar_lea.vmem [#allocation4], %s118
    %v120 = vld [vmem:[%s119] sm:$0x1]
    %v121 = vld [vmem:[#allocation7 + $0x4] sm:$0x1]
    %v122 = vadd.f32 %v121, %v120
    %123 = vst [vmem:[#allocation7 + $0x4] sm:$0x1] %v122
    %s124 = sadd.s32 %s33, 13
    %s125 = sld [smem:[#allocation3 + %s124]]
    %s126 = scalar_lea.vmem [#allocation4], %s125
    %v127 = vld [vmem:[%s126] sm:$0x1]
    %v128 = vld [vmem:[#allocation7 + $0x5] sm:$0x1]
    %v129 = vadd.f32 %v128, %v127
    %130 = vst [vmem:[#allocation7 + $0x5] sm:$0x1] %v129
    %s131 = sadd.s32 %s33, 14
    %s132 = sld [smem:[#allocation3 + %s131]]
    %s133 = scalar_lea.vmem [#allocation4], %s132
    %v134 = vld [vmem:[%s133] sm:$0x1]
    %v135 = vld [vmem:[#allocation7 + $0x6] sm:$0x1]
    %v136 = vadd.f32 %v135, %v134
    %137 = vst [vmem:[#allocation7 + $0x6] sm:$0x1] %v136
    %s138 = sadd.s32 %s33, 15
    %s139 = sld [smem:[#allocation3 + %s138]]
    %s140 = scalar_lea.vmem [#allocation4], %s139
    %v141 = vld [vmem:[%s140] sm:$0x1]
    %v142 = vld [vmem:[#allocation7 + $0x7] sm:$0x1]
    %v143 = vadd.f32 %v142, %v141
    %144 = vst [vmem:[#allocation7 + $0x7] sm:$0x1] %v143
    %s145 = sadd.s32 %s33, 16
    %s146 = sld [smem:[#allocation3 + %s145]]
    %s147 = scalar_lea.vmem [#allocation4], %s146
    %v148 = vld [vmem:[%s147] sm:$0x1]
    %v149 = vld [vmem:[#allocation7] sm:$0x1]
    %v150 = vadd.f32 %v149, %v148
    %151 = vst [vmem:[#allocation7] sm:$0x1] %v150
    %s152 = sadd.s32 %s33, 17
    %s153 = sld [smem:[#allocation3 + %s152]]
    %s154 = scalar_lea.vmem [#allocation4], %s153
    %v155 = vld [vmem:[%s154] sm:$0x1]
    %v156 = vld [vmem:[#allocation7 + $0x1] sm:$0x1]
    %v157 = vadd.f32 %v156, %v155
    %158 = vst [vmem:[#allocation7 + $0x1] sm:$0x1] %v157
    %s159 = sadd.s32 %s33, 18
    %s160 = sld [smem:[#allocation3 + %s159]]
    %s161 = scalar_lea.vmem [#allocation4], %s160
    %v162 = vld [vmem:[%s161] sm:$0x1]
    %v163 = vld [vmem:[#allocation7 + $0x2] sm:$0x1]
    %v164 = vadd.f32 %v163, %v162
    %165 = vst [vmem:[#allocation7 + $0x2] sm:$0x1] %v164
    %s166 = sadd.s32 %s33, 19
    %s167 = sld [smem:[#allocation3 + %s166]]
    %s168 = scalar_lea.vmem [#allocation4], %s167
    %v169 = vld [vmem:[%s168] sm:$0x1]
    %v170 = vld [vmem:[#allocation7 + $0x3] sm:$0x1]
    %v171 = vadd.f32 %v170, %v169
    %172 = vst [vmem:[#allocation7 + $0x3] sm:$0x1] %v171
    %s173 = sadd.s32 %s33, 20
    %s174 = sld [smem:[#allocation3 + %s173]]
    %s175 = scalar_lea.vmem [#allocation4], %s174
    %v176 = vld [vmem:[%s175] sm:$0x1]
    %v177 = vld [vmem:[#allocation7 + $0x4] sm:$0x1]
    %v178 = vadd.f32 %v177, %v176
    %179 = vst [vmem:[#allocation7 + $0x4] sm:$0x1] %v178
    %s180 = sadd.s32 %s33, 21
    %s181 = sld [smem:[#allocation3 + %s180]]
    %s182 = scalar_lea.vmem [#allocation4], %s181
    %v183 = vld [vmem:[%s182] sm:$0x1]
    %v184 = vld [vmem:[#allocation7 + $0x5] sm:$0x1]
    %v185 = vadd.f32 %v184, %v183
    %186 = vst [vmem:[#allocation7 + $0x5] sm:$0x1] %v185
    %s187 = sadd.s32 %s33, 22
    %s188 = sld [smem:[#allocation3 + %s187]]
    %s189 = scalar_lea.vmem [#allocation4], %s188
    %v190 = vld [vmem:[%s189] sm:$0x1]
    %v191 = vld [vmem:[#allocation7 + $0x6] sm:$0x1]
    %v192 = vadd.f32 %v191, %v190
    %193 = vst [vmem:[#allocation7 + $0x6] sm:$0x1] %v192
    %s194 = sadd.s32 %s33, 23
    %s195 = sld [smem:[#allocation3 + %s194]]
    %s196 = scalar_lea.vmem [#allocation4], %s195
    %v197 = vld [vmem:[%s196] sm:$0x1]
    %v198 = vld [vmem:[#allocation7 + $0x7] sm:$0x1]
    %v199 = vadd.f32 %v198, %v197
    %200 = vst [vmem:[#allocation7 + $0x7] sm:$0x1] %v199
    %s201 = sadd.s32 %s33, 24
    %s202 = sld [smem:[#allocation3 + %s201]]
    %s203 = scalar_lea.vmem [#allocation4], %s202
    %v204 = vld [vmem:[%s203] sm:$0x1]
    %v205 = vld [vmem:[#allocation7] sm:$0x1]
    %v206 = vadd.f32 %v205, %v204
    %207 = vst [vmem:[#allocation7] sm:$0x1] %v206
    %s208 = sadd.s32 %s33, 25
    %s209 = sld [smem:[#allocation3 + %s208]]
    %s210 = scalar_lea.vmem [#allocation4], %s209
    %v211 = vld [vmem:[%s210] sm:$0x1]
    %v212 = vld [vmem:[#allocation7 + $0x1] sm:$0x1]
    %v213 = vadd.f32 %v212, %v211
    %214 = vst [vmem:[#allocation7 + $0x1] sm:$0x1] %v213
    %s215 = sadd.s32 %s33, 26
    %s216 = sld [smem:[#allocation3 + %s215]]
    %s217 = scalar_lea.vmem [#allocation4], %s216
    %v218 = vld [vmem:[%s217] sm:$0x1]
    %v219 = vld [vmem:[#allocation7 + $0x2] sm:$0x1]
    %v220 = vadd.f32 %v219, %v218
    %221 = vst [vmem:[#allocation7 + $0x2] sm:$0x1] %v220
    %s222 = sadd.s32 %s33, 27
    %s223 = sld [smem:[#allocation3 + %s222]]
    %s224 = scalar_lea.vmem [#allocation4], %s223
    %v225 = vld [vmem:[%s224] sm:$0x1]
    %v226 = vld [vmem:[#allocation7 + $0x3] sm:$0x1]
    %v227 = vadd.f32 %v226, %v225
    %228 = vst [vmem:[#allocation7 + $0x3] sm:$0x1] %v227
    %s229 = sadd.s32 %s33, 28
    %s230 = sld [smem:[#allocation3 + %s229]]
    %s231 = scalar_lea.vmem [#allocation4], %s230
    %v232 = vld [vmem:[%s231] sm:$0x1]
    %v233 = vld [vmem:[#allocation7 + $0x4] sm:$0x1]
    %v234 = vadd.f32 %v233, %v232
    %235 = vst [vmem:[#allocation7 + $0x4] sm:$0x1] %v234
    %s236 = sadd.s32 %s33, 29
    %s237 = sld [smem:[#allocation3 + %s236]]
    %s238 = scalar_lea.vmem [#allocation4], %s237
    %v239 = vld [vmem:[%s238] sm:$0x1]
    %v240 = vld [vmem:[#allocation7 + $0x5] sm:$0x1]
    %v241 = vadd.f32 %v240, %v239
    %242 = vst [vmem:[#allocation7 + $0x5] sm:$0x1] %v241
    %s243 = sadd.s32 %s33, 30
    %s244 = sld [smem:[#allocation3 + %s243]]
    %s245 = scalar_lea.vmem [#allocation4], %s244
    %v246 = vld [vmem:[%s245] sm:$0x1]
    %v247 = vld [vmem:[#allocation7 + $0x6] sm:$0x1]
    %v248 = vadd.f32 %v247, %v246
    %249 = vst [vmem:[#allocation7 + $0x6] sm:$0x1] %v248
    %s250 = sadd.s32 %s33, 31
    %s251 = sld [smem:[#allocation3 + %s250]]
    %s252 = scalar_lea.vmem [#allocation4], %s251
    %v253 = vld [vmem:[%s252] sm:$0x1]
    %v254 = vld [vmem:[#allocation7 + $0x7] sm:$0x1]
    %v255 = vadd.f32 %v254, %v253
    %256 = vst [vmem:[#allocation7 + $0x7] sm:$0x1] %v255
    %s257 = sadd.s32 %s33, 32
    %s258 = sld [smem:[#allocation3 + %s257]]
    %s259 = scalar_lea.vmem [#allocation4], %s258
    %v260 = vld [vmem:[%s259] sm:$0x1]
    %v261 = vld [vmem:[#allocation7] sm:$0x1]
    %v262 = vadd.f32 %v261, %v260
    %263 = vst [vmem:[#allocation7] sm:$0x1] %v262
    %s264 = sadd.s32 %s33, 33
    %s265 = sld [smem:[#allocation3 + %s264]]
    %s266 = scalar_lea.vmem [#allocation4], %s265
    %v267 = vld [vmem:[%s266] sm:$0x1]
    %v268 = vld [vmem:[#allocation7 + $0x1] sm:$0x1]
    %v269 = vadd.f32 %v268, %v267
    %270 = vst [vmem:[#allocation7 + $0x1] sm:$0x1] %v269
    %s271 = sadd.s32 %s33, 34
    %s272 = sld [smem:[#allocation3 + %s271]]
    %s273 = scalar_lea.vmem [#allocation4], %s272
    %v274 = vld [vmem:[%s273] sm:$0x1]
    %v275 = vld [vmem:[#allocation7 + $0x2] sm:$0x1]
    %v276 = vadd.f32 %v275, %v274
    %277 = vst [vmem:[#allocation7 + $0x2] sm:$0x1] %v276
    %s278 = sadd.s32 %s33, 35
    %s279 = sld [smem:[#allocation3 + %s278]]
    %s280 = scalar_lea.vmem [#allocation4], %s279
    %v281 = vld [vmem:[%s280] sm:$0x1]
    %v282 = vld [vmem:[#allocation7 + $0x3] sm:$0x1]
    %v283 = vadd.f32 %v282, %v281
    %284 = vst [vmem:[#allocation7 + $0x3] sm:$0x1] %v283
    %s285 = sadd.s32 %s33, 36
    %s286 = sld [smem:[#allocation3 + %s285]]
    %s287 = scalar_lea.vmem [#allocation4], %s286
    %v288 = vld [vmem:[%s287] sm:$0x1]
    %v289 = vld [vmem:[#allocation7 + $0x4] sm:$0x1]
    %v290 = vadd.f32 %v289, %v288
    %291 = vst [vmem:[#allocation7 + $0x4] sm:$0x1] %v290
    %s292 = sadd.s32 %s33, 37
    %s293 = sld [smem:[#allocation3 + %s292]]
    %s294 = scalar_lea.vmem [#allocation4], %s293
    %v295 = vld [vmem:[%s294] sm:$0x1]
    %v296 = vld [vmem:[#allocation7 + $0x5] sm:$0x1]
    %v297 = vadd.f32 %v296, %v295
    %298 = vst [vmem:[#allocation7 + $0x5] sm:$0x1] %v297
    %s299 = sadd.s32 %s33, 38
    %s300 = sld [smem:[#allocation3 + %s299]]
    %s301 = scalar_lea.vmem [#allocation4], %s300
    %v302 = vld [vmem:[%s301] sm:$0x1]
    %v303 = vld [vmem:[#allocation7 + $0x6] sm:$0x1]
    %v304 = vadd.f32 %v303, %v302
    %305 = vst [vmem:[#allocation7 + $0x6] sm:$0x1] %v304
    %s306 = sadd.s32 %s33, 39
    %s307 = sld [smem:[#allocation3 + %s306]]
    %s308 = scalar_lea.vmem [#allocation4], %s307
    %v309 = vld [vmem:[%s308] sm:$0x1]
    %v310 = vld [vmem:[#allocation7 + $0x7] sm:$0x1]
    %v311 = vadd.f32 %v310, %v309
    %312 = vst [vmem:[#allocation7 + $0x7] sm:$0x1] %v311
    %s313 = sadd.s32 %s33, 40
    %s314 = sld [smem:[#allocation3 + %s313]]
    %s315 = scalar_lea.vmem [#allocation4], %s314
    %v316 = vld [vmem:[%s315] sm:$0x1]
    %v317 = vld [vmem:[#allocation7] sm:$0x1]
    %v318 = vadd.f32 %v317, %v316
    %319 = vst [vmem:[#allocation7] sm:$0x1] %v318
    %s320 = sadd.s32 %s33, 41
    %s321 = sld [smem:[#allocation3 + %s320]]
    %s322 = scalar_lea.vmem [#allocation4], %s321
    %v323 = vld [vmem:[%s322] sm:$0x1]
    %v324 = vld [vmem:[#allocation7 + $0x1] sm:$0x1]
    %v325 = vadd.f32 %v324, %v323
    %326 = vst [vmem:[#allocation7 + $0x1] sm:$0x1] %v325
    %s327 = sadd.s32 %s33, 42
    %s328 = sld [smem:[#allocation3 + %s327]]
    %s329 = scalar_lea.vmem [#allocation4], %s328
    %v330 = vld [vmem:[%s329] sm:$0x1]
    %v331 = vld [vmem:[#allocation7 + $0x2] sm:$0x1]
    %v332 = vadd.f32 %v331, %v330
    %333 = vst [vmem:[#allocation7 + $0x2] sm:$0x1] %v332
    %s334 = sadd.s32 %s33, 43
    %s335 = sld [smem:[#allocation3 + %s334]]
    %s336 = scalar_lea.vmem [#allocation4], %s335
    %v337 = vld [vmem:[%s336] sm:$0x1]
    %v338 = vld [vmem:[#allocation7 + $0x3] sm:$0x1]
    %v339 = vadd.f32 %v338, %v337
    %340 = vst [vmem:[#allocation7 + $0x3] sm:$0x1] %v339
    %s341 = sadd.s32 %s33, 44
    %s342 = sld [smem:[#allocation3 + %s341]]
    %s343 = scalar_lea.vmem [#allocation4], %s342
    %v344 = vld [vmem:[%s343] sm:$0x1]
    %v345 = vld [vmem:[#allocation7 + $0x4] sm:$0x1]
    %v346 = vadd.f32 %v345, %v344
    %347 = vst [vmem:[#allocation7 + $0x4] sm:$0x1] %v346
    %s348 = sadd.s32 %s33, 45
    %s349 = sld [smem:[#allocation3 + %s348]]
    %s350 = scalar_lea.vmem [#allocation4], %s349
    %v351 = vld [vmem:[%s350] sm:$0x1]
    %v352 = vld [vmem:[#allocation7 + $0x5] sm:$0x1]
    %v353 = vadd.f32 %v352, %v351
    %354 = vst [vmem:[#allocation7 + $0x5] sm:$0x1] %v353
    %s355 = sadd.s32 %s33, 46
    %s356 = sld [smem:[#allocation3 + %s355]]
    %s357 = scalar_lea.vmem [#allocation4], %s356
    %v358 = vld [vmem:[%s357] sm:$0x1]
    %v359 = vld [vmem:[#allocation7 + $0x6] sm:$0x1]
    %v360 = vadd.f32 %v359, %v358
    %361 = vst [vmem:[#allocation7 + $0x6] sm:$0x1] %v360
    %s362 = sadd.s32 %s33, 47
    %s363 = sld [smem:[#allocation3 + %s362]]
    %s364 = scalar_lea.vmem [#allocation4], %s363
    %v365 = vld [vmem:[%s364] sm:$0x1]
    %v366 = vld [vmem:[#allocation7 + $0x7] sm:$0x1]
    %v367 = vadd.f32 %v366, %v365
    %368 = vst [vmem:[#allocation7 + $0x7] sm:$0x1] %v367
    %s369 = sadd.s32 %s33, 48
    %s370 = sld [smem:[#allocation3 + %s369]]
    %s371 = scalar_lea.vmem [#allocation4], %s370
    %v372 = vld [vmem:[%s371] sm:$0x1]
    %v373 = vld [vmem:[#allocation7] sm:$0x1]
    %v374 = vadd.f32 %v373, %v372
    %375 = vst [vmem:[#allocation7] sm:$0x1] %v374
    %s376 = sadd.s32 %s33, 49
    %s377 = sld [smem:[#allocation3 + %s376]]
    %s378 = scalar_lea.vmem [#allocation4], %s377
    %v379 = vld [vmem:[%s378] sm:$0x1]
    %v380 = vld [vmem:[#allocation7 + $0x1] sm:$0x1]
    %v381 = vadd.f32 %v380, %v379
    %382 = vst [vmem:[#allocation7 + $0x1] sm:$0x1] %v381
    %s383 = sadd.s32 %s33, 50
    %s384 = sld [smem:[#allocation3 + %s383]]
    %s385 = scalar_lea.vmem [#allocation4], %s384
    %v386 = vld [vmem:[%s385] sm:$0x1]
    %v387 = vld [vmem:[#allocation7 + $0x2] sm:$0x1]
    %v388 = vadd.f32 %v387, %v386
    %389 = vst [vmem:[#allocation7 + $0x2] sm:$0x1] %v388
    %s390 = sadd.s32 %s33, 51
    %s391 = sld [smem:[#allocation3 + %s390]]
    %s392 = scalar_lea.vmem [#allocation4], %s391
    %v393 = vld [vmem:[%s392] sm:$0x1]
    %v394 = vld [vmem:[#allocation7 + $0x3] sm:$0x1]
    %v395 = vadd.f32 %v394, %v393
    %396 = vst [vmem:[#allocation7 + $0x3] sm:$0x1] %v395
    %s397 = sadd.s32 %s33, 52
    %s398 = sld [smem:[#allocation3 + %s397]]
    %s399 = scalar_lea.vmem [#allocation4], %s398
    %v400 = vld [vmem:[%s399] sm:$0x1]
    %v401 = vld [vmem:[#allocation7 + $0x4] sm:$0x1]
    %v402 = vadd.f32 %v401, %v400
    %403 = vst [vmem:[#allocation7 + $0x4] sm:$0x1] %v402
    %s404 = sadd.s32 %s33, 53
    %s405 = sld [smem:[#allocation3 + %s404]]
    %s406 = scalar_lea.vmem [#allocation4], %s405
    %v407 = vld [vmem:[%s406] sm:$0x1]
    %v408 = vld [vmem:[#allocation7 + $0x5] sm:$0x1]
    %v409 = vadd.f32 %v408, %v407
    %410 = vst [vmem:[#allocation7 + $0x5] sm:$0x1] %v409
    %s411 = sadd.s32 %s33, 54
    %s412 = sld [smem:[#allocation3 + %s411]]
    %s413 = scalar_lea.vmem [#allocation4], %s412
    %v414 = vld [vmem:[%s413] sm:$0x1]
    %v415 = vld [vmem:[#allocation7 + $0x6] sm:$0x1]
    %v416 = vadd.f32 %v415, %v414
    %417 = vst [vmem:[#allocation7 + $0x6] sm:$0x1] %v416
    %s418 = sadd.s32 %s33, 55
    %s419 = sld [smem:[#allocation3 + %s418]]
    %s420 = scalar_lea.vmem [#allocation4], %s419
    %v421 = vld [vmem:[%s420] sm:$0x1]
    %v422 = vld [vmem:[#allocation7 + $0x7] sm:$0x1]
    %v423 = vadd.f32 %v422, %v421
    %424 = vst [vmem:[#allocation7 + $0x7] sm:$0x1] %v423
    %s425 = sadd.s32 %s33, 56
    %s426 = sld [smem:[#allocation3 + %s425]]
    %s427 = scalar_lea.vmem [#allocation4], %s426
    %v428 = vld [vmem:[%s427] sm:$0x1]
    %v429 = vld [vmem:[#allocation7] sm:$0x1]
    %v430 = vadd.f32 %v429, %v428
    %431 = vst [vmem:[#allocation7] sm:$0x1] %v430
    %s432 = sadd.s32 %s33, 57
    %s433 = sld [smem:[#allocation3 + %s432]]
    %s434 = scalar_lea.vmem [#allocation4], %s433
    %v435 = vld [vmem:[%s434] sm:$0x1]
    %v436 = vld [vmem:[#allocation7 + $0x1] sm:$0x1]
    %v437 = vadd.f32 %v436, %v435
    %438 = vst [vmem:[#allocation7 + $0x1] sm:$0x1] %v437
    %s439 = sadd.s32 %s33, 58
    %s440 = sld [smem:[#allocation3 + %s439]]
    %s441 = scalar_lea.vmem [#allocation4], %s440
    %v442 = vld [vmem:[%s441] sm:$0x1]
    %v443 = vld [vmem:[#allocation7 + $0x2] sm:$0x1]
    %v444 = vadd.f32 %v443, %v442
    %445 = vst [vmem:[#allocation7 + $0x2] sm:$0x1] %v444
    %s446 = sadd.s32 %s33, 59
    %s447 = sld [smem:[#allocation3 + %s446]]
    %s448 = scalar_lea.vmem [#allocation4], %s447
    %v449 = vld [vmem:[%s448] sm:$0x1]
    %v450 = vld [vmem:[#allocation7 + $0x3] sm:$0x1]
    %v451 = vadd.f32 %v450, %v449
    %452 = vst [vmem:[#allocation7 + $0x3] sm:$0x1] %v451
    %s453 = sadd.s32 %s33, 60
    %s454 = sld [smem:[#allocation3 + %s453]]
    %s455 = scalar_lea.vmem [#allocation4], %s454
    %v456 = vld [vmem:[%s455] sm:$0x1]
    %v457 = vld [vmem:[#allocation7 + $0x4] sm:$0x1]
    %v458 = vadd.f32 %v457, %v456
    %459 = vst [vmem:[#allocation7 + $0x4] sm:$0x1] %v458
    %s460 = sadd.s32 %s33, 61
    %s461 = sld [smem:[#allocation3 + %s460]]
    %s462 = scalar_lea.vmem [#allocation4], %s461
    %v463 = vld [vmem:[%s462] sm:$0x1]
    %v464 = vld [vmem:[#allocation7 + $0x5] sm:$0x1]
    %v465 = vadd.f32 %v464, %v463
    %466 = vst [vmem:[#allocation7 + $0x5] sm:$0x1] %v465
    %s467 = sadd.s32 %s33, 62
    %s468 = sld [smem:[#allocation3 + %s467]]
    %s469 = scalar_lea.vmem [#allocation4], %s468
    %v470 = vld [vmem:[%s469] sm:$0x1]
    %v471 = vld [vmem:[#allocation7 + $0x6] sm:$0x1]
    %v472 = vadd.f32 %v471, %v470
    %473 = vst [vmem:[#allocation7 + $0x6] sm:$0x1] %v472
    %s474 = sadd.s32 %s33, 63
    %s475 = sld [smem:[#allocation3 + %s474]]
    %s476 = scalar_lea.vmem [#allocation4], %s475
    %v477 = vld [vmem:[%s476] sm:$0x1]
    %v478 = vld [vmem:[#allocation7 + $0x7] sm:$0x1]
    %v479 = vadd.f32 %v478, %v477
    %480 = vst [vmem:[#allocation7 + $0x7] sm:$0x1] %v479
    // Predicated region
    $region14: #{tpu_custom_call.1} parent=1 // pred_check
      _
    $region15: #{tpu_custom_call.1} parent=1 // pred_check_branch
      %482 = sbr.rel (0) target = $region17
    $region16: #{tpu_custom_call.1} parent=1 // pred_region
      %s484 = ssub.s32 128, 128
      %485 = vsyncadd [#allocation6], %s484
      %s487 = sshll.u32 [#allocation7], 4
      %s488 = int_to_ptr.vmem [resolvable:$true] %s487
      %490 = dma.vmem_to_hbm [thread:$0]  %s488, 128, %s2, [#allocation6]
    $region17: #{tpu_custom_call.1} parent=1 // pred_fallthru
      _
    // Predicated region
    $region18: #{tpu_custom_call.1} parent=1 // pred_check
      _
    $region19: #{tpu_custom_call.1} parent=1 // pred_check_branch
      %492 = sbr.rel (0) target = $region21
    $region20: #{tpu_custom_call.1} parent=1 // pred_region
      %493 = dma.done [#allocation6], 128
    $region21: #{tpu_custom_call.1} parent=1 // pred_fallthru
      _
    %494 = vsyncpa [#allocation5], 1
    %495 = vsyncpa [#allocation6], 1

</llo_original>
